<compile_context>
chip_gen: v7x
topology: tpu7x:2x2x1
jax: 0.10.0
libtpu: 0.0.40
codegen_flags: <defaults>
</compile_context>

<pallas_src>
import functools

import jax
import jax.numpy as jnp
from jax.experimental import pallas as pl
from jax.experimental.pallas import tpu as pltpu

C_FEAT = 1280

# Upper bound on VMEM held by everything except the streamed feature block:
# double-buffered weight matrices + (1,n) vectors (sublane padded), the f32
# accumulator scratch (max TB=256), two output blocks, plus slack for Mosaic
# internals.
_RESERVE_BYTES = (
    2 * 4 * (C_FEAT * 256 + 256 * 128)      # w1, w2 (f32, 2 pipeline buffers)
    + 2 * 4 * 8 * (3 * 256 + 3 * 128)       # b1/bn_s/bn_b + b2/w3/b3, padded
    + 256 * C_FEAT * 4                      # acc scratch
    + 2 * 256 * 128 * 4                     # output blocks
    + (2 << 20)                             # slack
)


def _round_up(x, m):
    return (x + m - 1) // m * m


def _sublane(elem_bytes):
    return max(8, 32 // elem_bytes)          # 8 for f32, 16 for bf16


def _vmem_capacity_bytes():
    try:
        return int(pltpu.get_tpu_info().vmem_capacity_bytes)
    except Exception:
        return 64 * 1024 * 1024              # conservative: v7x per-TC VMEM


def _block_elem_budget(elem_bytes, vmem_bytes):
    """Max element count of one streamed (TB, THW, 1280) feature block."""
    # Conservative per-element VMEM cost of the streamed block:
    #   2 x elem_bytes  double-buffered pipeline copies (BlockSpec default)
    #   1 x elem_bytes  the in-kernel load of the block (worst case: Mosaic
    #                   does not fold the load into the reduction)
    #   4 bytes         f32 upcast feeding the sum when streaming sub-f32
    # TODO(synk): check with pl.lower_as_mlir whether Mosaic folds the load /
    # upcast into the reduce; if so this can be relaxed to ~2x + epsilon.
    per_elem = 3 * elem_bytes + (4 if elem_bytes < 4 else 0)
    pool = int(0.80 * vmem_bytes) - _RESERVE_BYTES
    return max(pool, 4 * 1024 * 1024) // per_elem


def _choose_tiles(B, HW, elem_bytes, max_elems):
    """Pick (TB, THW) for the streamed (TB, THW, 1280) feature block."""
    subl = _sublane(elem_bytes)
    hw_pad = _round_up(HW, subl)             # VMEM sublane rows per image
    b8 = _round_up(B, 8)

    # Preferred: full spatial extent per block (no spatial tail masking).
    tb = (max_elems // (hw_pad * C_FEAT)) // 8 * 8
    if tb >= 8:
        tb = min(tb, b8, 256)
        if B > 8:
            # v7x: keep >= 2 batch tiles so the "parallel" axis feeds both
            # TensorCores; also keeps the garbage batch tail modest. (Edge
            # DMAs are clamped, so the tail costs no HBM traffic either way.)
            tb = min(tb, _round_up(-(-B // 2), 8))
        return int(tb), HW

    # Huge spatial maps: 8 batch rows per block, tile the spatial axis
    # (sublane-aligned so bf16/f32 tiling is always happy).
    thw = (max_elems // (8 * C_FEAT)) // subl * subl
    thw = max(subl, thw)
    if thw >= HW:
        return 8, HW
    return 8, int(thw)


def _glassnet_head_kernel(feat_ref,             # (TB, THW, 1280)  bf16/f32
                          w1_ref, b1_ref,       # (1280, 256), (1, 256)
                          bn_s_ref, bn_b_ref,   # (1, 256), (1, 256)
                          w2_ref, b2_ref,       # (256, 128), (1, 128)
                          w3_ref, b3_ref,       # (1, 128), (1, 1)
                          out_ref,              # (TB, 128) lane-dense
                          acc_ref,              # (TB, 1280) f32 scratch
                          *, inv_hw, hw, thw):
    k = pl.program_id(1)
    nk = pl.num_programs(1)

    @pl.when(k == 0)
    def _():
        acc_ref[...] = jnp.zeros_like(acc_ref)

    def accumulate(block):
        # Spatial SUM accumulated in f32 (dtype= lets Mosaic fold the upcast
        # into the reduction where possible).
        acc_ref[...] += jnp.sum(block, axis=1, dtype=jnp.float32)

    tail = hw % thw                              # static python int
    if tail == 0:
        accumulate(feat_ref[...])
    else:
        @pl.when(k < nk - 1)
        def _():
            accumulate(feat_ref[...])

        @pl.when(k == nk - 1)
        def _():
            # Ragged last spatial tile: Pallas does NOT zero out-of-bounds
            # reads, so mask the garbage rows before accumulating.
            blk = feat_ref[...]
            sidx = jax.lax.broadcasted_iota(jnp.int32, (1, thw, 1), 1)
            accumulate(jnp.where(sidx < tail, blk, jnp.zeros_like(blk)))

    @pl.when(k == nk - 1)
    def _():
        # AdaptiveAvgPool2d(1) + flatten: sum * 1/(H*W).
        pooled = acc_ref[...] * inv_hw                               # (TB, 1280)
        # Linear(1280, 256)
        h = jnp.dot(pooled, w1_ref[...],
                    preferred_element_type=jnp.float32) + b1_ref[...]
        # BatchNorm1d(256), eval mode (precomputed affine). Dropout = identity.
        h = h * bn_s_ref[...] + bn_b_ref[...]
        # Linear(256, 128)
        h = jnp.dot(h, w2_ref[...],
                    preferred_element_type=jnp.float32) + b2_ref[...]
        # Linear(128, 1) as a VPU dot product (avoid N=1 on the MXU).
        y = jnp.sum(h * w3_ref[...], axis=-1, keepdims=True) + b3_ref[...]
        y = jax.nn.sigmoid(y)                                        # (TB, 1)
        # Lane-dense store; wrapper slices column 0. Garbage batch-tail rows
        # are harmless (row-independent) and sliced off by the wrapper.
        out_ref[...] = jnp.broadcast_to(y, out_ref.shape)


def glassnet_head(features_flat, params):
    """features_flat: (B, HW, 1280) flattened backbone features (bf16 or f32).

    Returns (B, 1) float32 sigmoid probabilities.
    """
    B, HW, C = features_flat.shape
    assert C == C_FEAT

    (w1, b1, gamma, beta, run_mean, run_var, w2, b2, w3, b3) = params
    eps = 1e-5
    inv_std = gamma / jnp.sqrt(run_var + eps)
    bn_scale = inv_std.reshape(1, -1)
    bn_shift = (beta - run_mean * inv_std).reshape(1, -1)

    elem_bytes = jnp.dtype(features_flat.dtype).itemsize
    vmem = _vmem_capacity_bytes()
    TB, THW = _choose_tiles(B, HW, elem_bytes, _block_elem_budget(elem_bytes, vmem))

    nb = pl.cdiv(B, TB)
    nk = pl.cdiv(HW, THW)
    B_out = nb * TB                               # only the (tiny) output is padded

    # vmem_limit computed from the actual allocation, ~10-15% headroom.
    subl = _sublane(elem_bytes)
    block_elems = TB * _round_up(THW, subl) * C_FEAT
    need = (2 * block_elems * elem_bytes
            + block_elems * (elem_bytes + (4 if elem_bytes < 4 else 0))
            + _RESERVE_BYTES)
    vmem_limit = max(32 * 1024 * 1024, need + need // 8)
    vmem_limit = int(min(vmem_limit, 0.87 * vmem))

    kernel = functools.partial(_glassnet_head_kernel,
                               inv_hw=1.0 / HW, hw=HW, thw=THW)

    def const2d(shape):
        # Weights/biases: constant block index -> resident in VMEM across grid.
        return pl.BlockSpec(shape, lambda i, k: (0, 0))

    cost = pl.CostEstimate(
        flops=int(B * HW * C_FEAT + 2 * B * (C_FEAT * 256 + 256 * 128 + 128)),
        transcendentals=int(B),
        bytes_accessed=int(B * HW * C_FEAT * elem_bytes
                           + 4 * (C_FEAT * 256 + 256 * 128 + 5 * 256 + 3 * 128 + 1)
                           + B_out * 128 * 4),
    )

    out = pl.pallas_call(
        kernel,
        out_shape=jax.ShapeDtypeStruct((B_out, 128), jnp.float32),
        grid_spec=pltpu.PrefetchScalarGridSpec(
            num_scalar_prefetch=0,
            grid=(nb, nk),
            in_specs=[
                pl.BlockSpec((TB, THW, C), lambda i, k: (i, k, 0)),  # streamed
                const2d((C_FEAT, 256)), const2d((1, 256)),
                const2d((1, 256)), const2d((1, 256)),
                const2d((256, 128)), const2d((1, 128)),
                const2d((1, 128)), const2d((1, 1)),
            ],
            out_specs=pl.BlockSpec((TB, 128), lambda i, k: (i, 0)),
            scratch_shapes=[pltpu.VMEM((TB, C_FEAT), jnp.float32)],
        ),
        compiler_params=pltpu.CompilerParams(
            dimension_semantics=("parallel", "arbitrary"),
            vmem_limit_bytes=vmem_limit,
        ),
        cost_estimate=cost,
    )(features_flat,
      w1, b1.reshape(1, -1),
      bn_scale, bn_shift,
      w2, b2.reshape(1, -1),
      w3.reshape(1, -1), b3.reshape(1, 1))

    return out[:B, :1]


def glassnet_head_nhwc(features_nhwc, params):
    # TODO(synk): if W is not a multiple of the sublane tile (8 f32 / 16 bf16,
    # e.g. EfficientNet-b0's 7x7 map) XLA may relayout on this reshape (one
    # extra HBM pass); prefer feeding already-flattened (B, HW, 1280) features.
    B, H, W, C = features_nhwc.shape
    return glassnet_head(features_nhwc.reshape(B, H * W, C), params)


def glassnet_head_nchw(features_nchw, params):
    # TODO(synk): NCHW -> NHWC transpose is a full extra HBM pass; prefer an
    # NHWC/flattened-emitting backbone (TPU convs are NHWC anyway).
    return glassnet_head_nhwc(jnp.transpose(features_nchw, (0, 2, 3, 1)), params)


def init_params(key):
    ks = jax.random.split(key, 8)
    # Linear weights stored as (in, out) == torch weight.T
    w1 = jax.random.normal(ks[0], (1280, 256), jnp.float32) * 0.02
    b1 = jax.random.normal(ks[1], (256,), jnp.float32) * 0.02
    gamma = 1.0 + 0.1 * jax.random.normal(ks[2], (256,), jnp.float32)
    beta = 0.1 * jax.random.normal(ks[3], (256,), jnp.float32)
    run_mean = 0.1 * jax.random.normal(ks[4], (256,), jnp.float32)
    run_var = jnp.abs(1.0 + 0.1 * jax.random.normal(ks[5], (256,), jnp.float32))
    w2 = jax.random.normal(ks[6], (256, 128), jnp.float32) * 0.05
    b2 = jnp.zeros((128,), jnp.float32)
    w3 = jax.random.normal(ks[7], (128, 1), jnp.float32) * 0.1
    b3 = jnp.zeros((1,), jnp.float32)
    return (w1, b1, gamma, beta, run_mean, run_var, w2, b2, w3, b3)


def _reference(features_flat, params):
    """Pure-JAX reference (eval-mode semantics) for a sanity check."""
    (w1, b1, gamma, beta, run_mean, run_var, w2, b2, w3, b3) = params
    hi = jax.lax.Precision.HIGHEST
    x = jnp.mean(features_flat.astype(jnp.float32), axis=1)         # (B, 1280)
    x = jnp.dot(x, w1, precision=hi) + b1
    x = (x - run_mean) / jnp.sqrt(run_var + 1e-5) * gamma + beta    # BN eval
    x = jnp.dot(x, w2, precision=hi) + b2
    x = jnp.dot(x, w3, precision=hi) + b3
    return jax.nn.sigmoid(x)


if __name__ == "__main__":
    key = jax.random.PRNGKey(0)
    k_feat, k_param = jax.random.split(key)

    # Backbone feature map, already flattened (B, H*W, 1280) with channels on
    # the lane dim — (batch=2, 4x4 spatial, 1280 ch), streamed in bf16 to
    # halve HBM traffic.
    B, H, W = 2, 4, 4
    features = jax.random.normal(k_feat, (B, H * W, C_FEAT), jnp.float32)
    features_bf16 = features.astype(jnp.bfloat16)
    params = init_params(k_param)

    out = glassnet_head(features_bf16, params)
    out = jax.block_until_ready(out)

    ref = _reference(features_bf16, params)   # same bf16-quantized inputs
    assert out.shape == (B, 1), out.shape
    assert jnp.allclose(out, ref, atol=1e-3, rtol=1e-3), (out, ref)

    print("KERNEL_OK")
</pallas_src>

<mosaic_0001>
module attributes {stable_mosaic.version = 11 : i64} {
  func.func @_glassnet_head_kernel(%arg0: i32, %arg1: i32, %arg2: memref<8x16x1280xbf16, #tpu.memory_space<vmem>>, %arg3: memref<1280x256xf32, #tpu.memory_space<vmem>>, %arg4: memref<1x256xf32, #tpu.memory_space<vmem>>, %arg5: memref<1x256xf32, #tpu.memory_space<vmem>>, %arg6: memref<1x256xf32, #tpu.memory_space<vmem>>, %arg7: memref<256x128xf32, #tpu.memory_space<vmem>>, %arg8: memref<1x128xf32, #tpu.memory_space<vmem>>, %arg9: memref<1x128xf32, #tpu.memory_space<vmem>>, %arg10: memref<1x1xf32, #tpu.memory_space<vmem>>, %arg11: memref<8x128xf32, #tpu.memory_space<vmem>>, %arg12: memref<8x1280xf32, #tpu.memory_space<vmem>>) attributes {dimension_semantics = [#tpu.dimension_semantics<parallel>, #tpu.dimension_semantics<arbitrary>], iteration_bounds = array<i64: 1, 1>, scalar_prefetch = 0 : i64, scratch_operands = 1 : i64, tpu.core_type = #tpu.core_type<tc>, window_params = [{transform_indices = @transform_0, window_bounds = array<i64: 8, 16, 1280>}, {pipeline_mode = #tpu.pipeline_mode<synchronous>, transform_indices = @transform_1, window_bounds = array<i64: 1280, 256>}, {pipeline_mode = #tpu.pipeline_mode<synchronous>, transform_indices = @transform_2, window_bounds = array<i64: 1, 256>}, {pipeline_mode = #tpu.pipeline_mode<synchronous>, transform_indices = @transform_3, window_bounds = array<i64: 1, 256>}, {pipeline_mode = #tpu.pipeline_mode<synchronous>, transform_indices = @transform_4, window_bounds = array<i64: 1, 256>}, {pipeline_mode = #tpu.pipeline_mode<synchronous>, transform_indices = @transform_5, window_bounds = array<i64: 256, 128>}, {pipeline_mode = #tpu.pipeline_mode<synchronous>, transform_indices = @transform_6, window_bounds = array<i64: 1, 128>}, {pipeline_mode = #tpu.pipeline_mode<synchronous>, transform_indices = @transform_7, window_bounds = array<i64: 1, 128>}, {pipeline_mode = #tpu.pipeline_mode<synchronous>, transform_indices = @transform_8, window_bounds = array<i64: 1, 1>}, {transform_indices = @transform_9, window_bounds = array<i64: 8, 128>}]} {
    %c0_i32 = arith.constant 0 : i32
    %0 = arith.cmpi eq, %arg1, %c0_i32 : i32
    %1 = arith.extui %0 : i1 to i32
    %c0_i32_0 = arith.constant 0 : i32
    %2 = arith.cmpi ne, %1, %c0_i32_0 : i32
    scf.if %2 {
      %cst_9 = arith.constant 0.000000e+00 : f32
      %12 = vector.broadcast %cst_9 : f32 to vector<8x1280xf32>
      %c0_10 = arith.constant 0 : index
      %c0_11 = arith.constant 0 : index
      %13 = vector.load %arg12[%c0_10, %c0_11] : memref<8x1280xf32, #tpu.memory_space<vmem>>, vector<8x1280xf32>
      tpu.vector_store %arg12[%c0_10, %c0_11], %12 {strides = array<i32>} : memref<8x1280xf32, #tpu.memory_space<vmem>>, vector<8x1280xf32>,
    } else {
    }
    %c0 = arith.constant 0 : index
    %c0_1 = arith.constant 0 : index
    %c0_2 = arith.constant 0 : index
    %3 = vector.load %arg2[%c0, %c0_1, %c0_2] : memref<8x16x1280xbf16, #tpu.memory_space<vmem>>, vector<8x16x1280xbf16>
    %c0_3 = arith.constant 0 : index
    %c0_4 = arith.constant 0 : index
    %4 = vector.load %arg12[%c0_3, %c0_4] : memref<8x1280xf32, #tpu.memory_space<vmem>>, vector<8x1280xf32>
    %5 = arith.extf %3 : vector<8x16x1280xbf16> to vector<8x16x1280xf32>
    %cst = arith.constant dense<0.000000e+00> : vector<8x1280xf32>
    %6 = vector.multi_reduction <add>, %5, %cst [1] : vector<8x16x1280xf32> to vector<8x1280xf32>
    %7 = arith.addf %4, %6 : vector<8x1280xf32>
    %c0_5 = arith.constant 0 : index
    %c0_6 = arith.constant 0 : index
    %8 = vector.load %arg12[%c0_5, %c0_6] : memref<8x1280xf32, #tpu.memory_space<vmem>>, vector<8x1280xf32>
    tpu.vector_store %arg12[%c0_5, %c0_6], %7 {strides = array<i32>} : memref<8x1280xf32, #tpu.memory_space<vmem>>, vector<8x1280xf32>,
    %c0_i32_7 = arith.constant 0 : i32
    %9 = arith.cmpi eq, %arg1, %c0_i32_7 : i32
    %10 = arith.extui %9 : i1 to i32
    %c0_i32_8 = arith.constant 0 : i32
    %11 = arith.cmpi ne, %10, %c0_i32_8 : i32
    scf.if %11 {
      %c0_9 = arith.constant 0 : index
      %c0_10 = arith.constant 0 : index
      %12 = vector.load %arg12[%c0_9, %c0_10] : memref<8x1280xf32, #tpu.memory_space<vmem>>, vector<8x1280xf32>
      %cst_11 = arith.constant 6.250000e-02 : f32
      %13 = vector.broadcast %cst_11 : f32 to vector<8x1280xf32>
      %14 = arith.mulf %12, %13 : vector<8x1280xf32>
      %c0_12 = arith.constant 0 : index
      %c0_13 = arith.constant 0 : index
      %15 = vector.load %arg3[%c0_12, %c0_13] : memref<1280x256xf32, #tpu.memory_space<vmem>>, vector<1280x256xf32>
      %cst_14 = arith.constant dense<0.000000e+00> : vector<8x256xf32>
      %16 = tpu.matmul %14, %15, %cst_14 {dimension_numbers = #tpu.dot_dimension_numbers<[1], [0], [0], [1], [0, 0, 1, 1], [], []>} : vector<8x1280xf32>, vector<1280x256xf32>, vector<8x256xf32> -> vector<8x256xf32>
      %c0_15 = arith.constant 0 : index
      %c0_16 = arith.constant 0 : index
      %17 = vector.load %arg4[%c0_15, %c0_16] : memref<1x256xf32, #tpu.memory_space<vmem>>, vector<1x256xf32>
      %18 = vector.broadcast %17 : vector<1x256xf32> to vector<8x256xf32>
      %19 = arith.addf %16, %18 : vector<8x256xf32>
      %c0_17 = arith.constant 0 : index
      %c0_18 = arith.constant 0 : index
      %20 = vector.load %arg5[%c0_17, %c0_18] : memref<1x256xf32, #tpu.memory_space<vmem>>, vector<1x256xf32>
      %21 = vector.broadcast %20 : vector<1x256xf32> to vector<8x256xf32>
      %22 = arith.mulf %19, %21 : vector<8x256xf32>
      %c0_19 = arith.constant 0 : index
      %c0_20 = arith.constant 0 : index
      %23 = vector.load %arg6[%c0_19, %c0_20] : memref<1x256xf32, #tpu.memory_space<vmem>>, vector<1x256xf32>
      %24 = vector.broadcast %23 : vector<1x256xf32> to vector<8x256xf32>
      %25 = arith.addf %22, %24 : vector<8x256xf32>
      %c0_21 = arith.constant 0 : index
      %c0_22 = arith.constant 0 : index
      %26 = vector.load %arg7[%c0_21, %c0_22] : memref<256x128xf32, #tpu.memory_space<vmem>>, vector<256x128xf32>
      %cst_23 = arith.constant dense<0.000000e+00> : vector<8x128xf32>
      %27 = tpu.matmul %25, %26, %cst_23 {dimension_numbers = #tpu.dot_dimension_numbers<[1], [0], [0], [1], [0, 0, 1, 1], [], []>} : vector<8x256xf32>, vector<256x128xf32>, vector<8x128xf32> -> vector<8x128xf32>
      %c0_24 = arith.constant 0 : index
      %c0_25 = arith.constant 0 : index
      %28 = vector.load %arg8[%c0_24, %c0_25] : memref<1x128xf32, #tpu.memory_space<vmem>>, vector<1x128xf32>
      %29 = vector.broadcast %28 : vector<1x128xf32> to vector<8x128xf32>
      %30 = arith.addf %27, %29 : vector<8x128xf32>
      %c0_26 = arith.constant 0 : index
      %c0_27 = arith.constant 0 : index
      %31 = vector.load %arg9[%c0_26, %c0_27] : memref<1x128xf32, #tpu.memory_space<vmem>>, vector<1x128xf32>
      %32 = vector.broadcast %31 : vector<1x128xf32> to vector<8x128xf32>
      %33 = arith.mulf %30, %32 : vector<8x128xf32>
      %cst_28 = arith.constant dense<0.000000e+00> : vector<8xf32>
      %34 = vector.multi_reduction <add>, %33, %cst_28 [1] : vector<8x128xf32> to vector<8xf32>
      %35 = vector.shape_cast %34 : vector<8xf32> to vector<8x1xf32>
      %c0_29 = arith.constant 0 : index
      %c0_30 = arith.constant 0 : index
      %36 = vector.load %arg10[%c0_29, %c0_30] : memref<1x1xf32, #tpu.memory_space<vmem>>, vector<1x1xf32>
      %37 = vector.broadcast %36 : vector<1x1xf32> to vector<8x1xf32>
      %38 = arith.addf %35, %37 : vector<8x1xf32>
      %39 = arith.negf %38 : vector<8x1xf32>
      %40 = math.exp %39 : vector<8x1xf32>
      %cst_31 = arith.constant 1.000000e+00 : f32
      %41 = vector.broadcast %cst_31 : f32 to vector<8x1xf32>
      %42 = arith.addf %41, %40 : vector<8x1xf32>
      %43 = arith.divf %41, %42 : vector<8x1xf32>
      %44 = vector.shape_cast %43 : vector<8x1xf32> to vector<8x1xf32>
      %45 = vector.broadcast %44 : vector<8x1xf32> to vector<8x128xf32>
      %c0_32 = arith.constant 0 : index
      %c0_33 = arith.constant 0 : index
      %46 = vector.load %arg11[%c0_32, %c0_33] : memref<8x128xf32, #tpu.memory_space<vmem>>, vector<8x128xf32>
      tpu.vector_store %arg11[%c0_32, %c0_33], %45 {strides = array<i32>} : memref<8x128xf32, #tpu.memory_space<vmem>>, vector<8x128xf32>,
    } else {
    }
    return
  }
  func.func @transform_0(%arg0: i32, %arg1: i32) -> (i32, i32, i32) {
    %c0_i32 = arith.constant 0 : i32
    %c0_i32_0 = arith.constant 0 : i32
    return %arg0, %arg1, %c0_i32 : i32, i32, i32
  }
  func.func @transform_1(%arg0: i32, %arg1: i32) -> (i32, i32) {
    %c0_i32 = arith.constant 0 : i32
    %c0_i32_0 = arith.constant 0 : i32
    %c0_i32_1 = arith.constant 0 : i32
    return %c0_i32, %c0_i32_0 : i32, i32
  }
  func.func @transform_2(%arg0: i32, %arg1: i32) -> (i32, i32) {
    %c0_i32 = arith.constant 0 : i32
    %c0_i32_0 = arith.constant 0 : i32
    %c0_i32_1 = arith.constant 0 : i32
    return %c0_i32, %c0_i32_0 : i32, i32
  }
  func.func @transform_3(%arg0: i32, %arg1: i32) -> (i32, i32) {
    %c0_i32 = arith.constant 0 : i32
    %c0_i32_0 = arith.constant 0 : i32
    %c0_i32_1 = arith.constant 0 : i32
    return %c0_i32, %c0_i32_0 : i32, i32
  }
  func.func @transform_4(%arg0: i32, %arg1: i32) -> (i32, i32) {
    %c0_i32 = arith.constant 0 : i32
    %c0_i32_0 = arith.constant 0 : i32
    %c0_i32_1 = arith.constant 0 : i32
    return %c0_i32, %c0_i32_0 : i32, i32
  }
  func.func @transform_5(%arg0: i32, %arg1: i32) -> (i32, i32) {
    %c0_i32 = arith.constant 0 : i32
    %c0_i32_0 = arith.constant 0 : i32
    %c0_i32_1 = arith.constant 0 : i32
    return %c0_i32, %c0_i32_0 : i32, i32
  }
  func.func @transform_6(%arg0: i32, %arg1: i32) -> (i32, i32) {
    %c0_i32 = arith.constant 0 : i32
    %c0_i32_0 = arith.constant 0 : i32
    %c0_i32_1 = arith.constant 0 : i32
    return %c0_i32, %c0_i32_0 : i32, i32
  }
  func.func @transform_7(%arg0: i32, %arg1: i32) -> (i32, i32) {
    %c0_i32 = arith.constant 0 : i32
    %c0_i32_0 = arith.constant 0 : i32
    %c0_i32_1 = arith.constant 0 : i32
    return %c0_i32, %c0_i32_0 : i32, i32
  }
  func.func @transform_8(%arg0: i32, %arg1: i32) -> (i32, i32) {
    %c0_i32 = arith.constant 0 : i32
    %c0_i32_0 = arith.constant 0 : i32
    %c0_i32_1 = arith.constant 0 : i32
    return %c0_i32, %c0_i32_0 : i32, i32
  }
  func.func @transform_9(%arg0: i32, %arg1: i32) -> (i32, i32) {
    %c0_i32 = arith.constant 0 : i32
    %c0_i32_0 = arith.constant 0 : i32
    return %arg0, %c0_i32 : i32, i32
  }
}

</mosaic_0001>

<llo_original>
// kernel: tpu_custom_call.1
$region0: #{tpu_custom_call.1}
  #allocation0 [shape = 'u32[]', space=smem, size = 0x4, offset = 0x4, fixed_abs, tag = 'smem constant byte address 0x4 - core index']
  #allocation1 [shape = 'u32[144,128]{1,0:T(1,128)}', space=vmem, size = 0x12000, scoped, tag = 'internal scratch']
  #allocation2 [shape = 'f32[8,1280]{1,0:T(8,128)}', space=vmem, size = 0xa000, scoped, tag = 'scratch operand']
  #allocation3 [shape = 'f32[1,1]{1,0:T(1,128)S(1)}', space=vmem, size = 0x200, scoped, tag = 'scoped memory for tpu_custom_call.1']
  %s0 = inlined_call_operand.hbm [shape: bf16[2,16,1280], index: 0, kind: input, shape index: {}]
  %s1 = inlined_call_operand.hbm [shape: f32[1280,256], index: 1, kind: input, shape index: {}]
  %s2 = inlined_call_operand.hbm [shape: f32[1,256], index: 2, kind: input, shape index: {}]
  %s3 = inlined_call_operand.hbm [shape: f32[1,256], index: 3, kind: input, shape index: {}]
  %s4 = inlined_call_operand.hbm [shape: f32[1,256], index: 4, kind: input, shape index: {}]
  %s5 = inlined_call_operand.hbm [shape: f32[256,128], index: 5, kind: input, shape index: {}]
  %s6 = inlined_call_operand.hbm [shape: f32[1,128], index: 6, kind: input, shape index: {}]
  %s7 = inlined_call_operand.hbm [shape: f32[1,128], index: 7, kind: input, shape index: {}]
  %s8 = inlined_call_operand.<no memory space> [shape: f32[1,1], index: 8, kind: input, shape index: {}]
  %s9 = inlined_call_operand.hbm [shape: f32[8,128], index: 9, kind: output, shape index: {}]
  %s10 = sld [smem:[#allocation0]]
  $region86: #{tpu_custom_call.1} parent=0
    _
  %s12 = ssub.s32 1, %s10
  %s13 = scalar_select 0, %s12, %s10
  %v14 = vstv %s8
  %15 = vst [vmem:[#allocation3] sm:$0x1] %v14
  $region1: #{tpu_custom_call.1} parent=0
    #allocation4 [shape = 'u8[327680]{0}', space=vmem, size = 0x50000, scoped, tag = 'input window, operand 0, single buffered']
    #allocation5 [shape = 's32[1]{0}', space=sflag, size = 0x4, scoped, tag = 'scoped memory for tpu_custom_call.1']
    #allocation6 [shape = 's32[1]{0}', space=sflag, size = 0x4, scoped, tag = 'scoped memory for tpu_custom_call.1']
    #allocation7 [shape = 'u8[1310720]{0}', space=vmem, size = 0x140000, scoped, tag = 'input window, operand 1, single buffered']
    #allocation8 [shape = 's32[1]{0}', space=sflag, size = 0x4, scoped, tag = 'scoped memory for tpu_custom_call.1']
    #allocation9 [shape = 'u8[1024]{0}', space=vmem, size = 0x400, scoped, tag = 'input window, operand 2, single buffered']
    #allocation10 [shape = 'u8[1024]{0}', space=vmem, size = 0x400, scoped, tag = 'input window, operand 3, single buffered']
    #allocation11 [shape = 's32[1]{0}', space=sflag, size = 0x4, scoped, tag = 'scoped memory for tpu_custom_call.1']
    #allocation12 [shape = 'u8[1024]{0}', space=vmem, size = 0x400, scoped, tag = 'input window, operand 4, single buffered']
    #allocation13 [shape = 'u8[131072]{0}', space=vmem, size = 0x20000, scoped, tag = 'input window, operand 5, single buffered']
    #allocation14 [shape = 's32[1]{0}', space=sflag, size = 0x4, scoped, tag = 'scoped memory for tpu_custom_call.1']
    #allocation15 [shape = 'u8[512]{0}', space=vmem, size = 0x400, scoped, tag = 'input window, operand 6, single buffered']
    #allocation16 [shape = 'u8[512]{0}', space=vmem, size = 0x400, scoped, tag = 'input window, operand 7, single buffered']
    #allocation17 [shape = 's32[1]{0}', space=sflag, size = 0x4, scoped, tag = 'scoped memory for tpu_custom_call.1']
    #allocation18 [shape = 'u8[4096]{0}', space=vmem, size = 0x1000, scoped, tag = 'output window, operand 0, single buffered']
    %16 = vsyncpa [#allocation5], 0
    %17 = vsyncpa [#allocation8], 0
    %18 = vsyncpa [#allocation11], 0
    %19 = vsyncpa [#allocation14], 0
    %20 = vsyncpa [#allocation17], 0
    %21 = vsyncpa [#allocation6], 0
    // Predicated region
    $region2: #{tpu_custom_call.1} parent=1 // pred_check
      _
    $region3: #{tpu_custom_call.1} parent=1 // pred_check_branch
      %23 = sbr.rel (0) target = $region5
    $region4: #{tpu_custom_call.1} parent=1 // pred_region
      %s25 = ssub.s32 10240, 2560
      %26 = vsyncadd [#allocation5], %s25
      %s27 = sshll.u32 [#allocation4], 4
      %s28 = int_to_ptr.vmem [resolvable:$true] %s27
      %33 = dma.hbm_to_vmem [thread:$0]  %s0, 2560, %s28, [#allocation5], 640, 640, 40
    $region5: #{tpu_custom_call.1} parent=1 // pred_fallthru
      _
    // Predicated region
    $region6: #{tpu_custom_call.1} parent=1 // pred_check
      _
    $region7: #{tpu_custom_call.1} parent=1 // pred_check_branch
      %35 = sbr.rel (0) target = $region9
    $region8: #{tpu_custom_call.1} parent=1 // pred_region
      %s37 = ssub.s32 40960, 40960
      %38 = vsyncadd [#allocation8], %s37
      %s39 = sshll.u32 [#allocation7], 4
      %s40 = int_to_ptr.vmem [resolvable:$true] %s39
      %45 = dma.hbm_to_vmem [thread:$0]  %s1, 40960, %s40, [#allocation8], 256, 256, 16
    $region9: #{tpu_custom_call.1} parent=1 // pred_fallthru
      _
    // Predicated region
    $region10: #{tpu_custom_call.1} parent=1 // pred_check
      _
    $region11: #{tpu_custom_call.1} parent=1 // pred_check_branch
      %47 = sbr.rel (0) target = $region13
    $region12: #{tpu_custom_call.1} parent=1 // pred_region
      %s49 = ssub.s32 32, 32
      %50 = vsyncadd [#allocation8], %s49
      %s52 = sshll.u32 [#allocation9], 4
      %s53 = int_to_ptr.vmem [resolvable:$true] %s52
      %55 = dma.hbm_to_vmem [thread:$0]  %s2, 32, %s53, [#allocation8]
    $region13: #{tpu_custom_call.1} parent=1 // pred_fallthru
      _
    // Predicated region
    $region14: #{tpu_custom_call.1} parent=1 // pred_check
      _
    $region15: #{tpu_custom_call.1} parent=1 // pred_check_branch
      %57 = sbr.rel (0) target = $region17
    $region16: #{tpu_custom_call.1} parent=1 // pred_region
      %s59 = ssub.s32 32, 32
      %60 = vsyncadd [#allocation11], %s59
      %s62 = sshll.u32 [#allocation10], 4
      %s63 = int_to_ptr.vmem [resolvable:$true] %s62
      %65 = dma.hbm_to_vmem [thread:$0]  %s3, 32, %s63, [#allocation11]
    $region17: #{tpu_custom_call.1} parent=1 // pred_fallthru
      _
    // Predicated region
    $region18: #{tpu_custom_call.1} parent=1 // pred_check
      _
    $region19: #{tpu_custom_call.1} parent=1 // pred_check_branch
      %67 = sbr.rel (0) target = $region21
    $region20: #{tpu_custom_call.1} parent=1 // pred_region
      %s69 = ssub.s32 32, 32
      %70 = vsyncadd [#allocation11], %s69
      %s72 = sshll.u32 [#allocation12], 4
      %s73 = int_to_ptr.vmem [resolvable:$true] %s72
      %75 = dma.hbm_to_vmem [thread:$0]  %s4, 32, %s73, [#allocation11]
    $region21: #{tpu_custom_call.1} parent=1 // pred_fallthru
      _
    // Predicated region
    $region22: #{tpu_custom_call.1} parent=1 // pred_check
      _
    $region23: #{tpu_custom_call.1} parent=1 // pred_check_branch
      %77 = sbr.rel (0) target = $region25
    $region24: #{tpu_custom_call.1} parent=1 // pred_region
      %s79 = ssub.s32 4096, 4096
      %80 = vsyncadd [#allocation14], %s79
      %s81 = sshll.u32 [#allocation13], 4
      %s82 = int_to_ptr.vmem [resolvable:$true] %s81
      %87 = dma.hbm_to_vmem [thread:$0]  %s5, 4096, %s82, [#allocation14], 128, 128, 8
    $region25: #{tpu_custom_call.1} parent=1 // pred_fallthru
      _
    // Predicated region
    $region26: #{tpu_custom_call.1} parent=1 // pred_check
      _
    $region27: #{tpu_custom_call.1} parent=1 // pred_check_branch
      %89 = sbr.rel (0) target = $region29
    $region28: #{tpu_custom_call.1} parent=1 // pred_region
      %s91 = ssub.s32 16, 16
      %92 = vsyncadd [#allocation14], %s91
      %s94 = sshll.u32 [#allocation15], 4
      %s95 = int_to_ptr.vmem [resolvable:$true] %s94
      %97 = dma.hbm_to_vmem [thread:$0]  %s6, 16, %s95, [#allocation14]
    $region29: #{tpu_custom_call.1} parent=1 // pred_fallthru
      _
    // Predicated region
    $region30: #{tpu_custom_call.1} parent=1 // pred_check
      _
    $region31: #{tpu_custom_call.1} parent=1 // pred_check_branch
      %99 = sbr.rel (0) target = $region33
    $region32: #{tpu_custom_call.1} parent=1 // pred_region
      %s101 = ssub.s32 16, 16
      %102 = vsyncadd [#allocation17], %s101
      %s104 = sshll.u32 [#allocation16], 4
      %s105 = int_to_ptr.vmem [resolvable:$true] %s104
      %107 = dma.hbm_to_vmem [thread:$0]  %s7, 16, %s105, [#allocation17]
    $region33: #{tpu_custom_call.1} parent=1 // pred_fallthru
      _
    // Predicated region
    $region34: #{tpu_custom_call.1} parent=1 // pred_check
      _
    $region35: #{tpu_custom_call.1} parent=1 // pred_check_branch
      %109 = sbr.rel (0) target = $region37
    $region36: #{tpu_custom_call.1} parent=1 // pred_region
      _
    $region37: #{tpu_custom_call.1} parent=1 // pred_fallthru
      _
    // Predicated region
    $region38: #{tpu_custom_call.1} parent=1 // pred_check
      _
    $region39: #{tpu_custom_call.1} parent=1 // pred_check_branch
      %111 = sbr.rel (0) target = $region41
    $region40: #{tpu_custom_call.1} parent=1 // pred_region
      %112 = dma.done [#allocation5], 10240
    $region41: #{tpu_custom_call.1} parent=1 // pred_fallthru
      _
    // Predicated region
    $region42: #{tpu_custom_call.1} parent=1 // pred_check
      _
    $region43: #{tpu_custom_call.1} parent=1 // pred_check_branch
      %114 = sbr.rel (0) target = $region45
    $region44: #{tpu_custom_call.1} parent=1 // pred_region
      %115 = dma.done [#allocation8], 40960
    $region45: #{tpu_custom_call.1} parent=1 // pred_fallthru
      _
    // Predicated region
    $region46: #{tpu_custom_call.1} parent=1 // pred_check
      _
    $region47: #{tpu_custom_call.1} parent=1 // pred_check_branch
      %117 = sbr.rel (0) target = $region49
    $region48: #{tpu_custom_call.1} parent=1 // pred_region
      %118 = dma.done [#allocation8], 32
    $region49: #{tpu_custom_call.1} parent=1 // pred_fallthru
      _
    // Predicated region
    $region50: #{tpu_custom_call.1} parent=1 // pred_check
      _
    $region51: #{tpu_custom_call.1} parent=1 // pred_check_branch
      %120 = sbr.rel (0) target = $region53
    $region52: #{tpu_custom_call.1} parent=1 // pred_region
      %121 = dma.done [#allocation11], 32
    $region53: #{tpu_custom_call.1} parent=1 // pred_fallthru
      _
    // Predicated region
    $region54: #{tpu_custom_call.1} parent=1 // pred_check
      _
    $region55: #{tpu_custom_call.1} parent=1 // pred_check_branch
      %123 = sbr.rel (0) target = $region57
    $region56: #{tpu_custom_call.1} parent=1 // pred_region
      %124 = dma.done [#allocation11], 32
    $region57: #{tpu_custom_call.1} parent=1 // pred_fallthru
      _
    // Predicated region
    $region58: #{tpu_custom_call.1} parent=1 // pred_check
      _
    $region59: #{tpu_custom_call.1} parent=1 // pred_check_branch
      %126 = sbr.rel (0) target = $region61
    $region60: #{tpu_custom_call.1} parent=1 // pred_region
      %127 = dma.done [#allocation14], 4096
    $region61: #{tpu_custom_call.1} parent=1 // pred_fallthru
      _
    // Predicated region
    $region62: #{tpu_custom_call.1} parent=1 // pred_check
      _
    $region63: #{tpu_custom_call.1} parent=1 // pred_check_branch
      %129 = sbr.rel (0) target = $region65
    $region64: #{tpu_custom_call.1} parent=1 // pred_region
      %130 = dma.done [#allocation14], 16
    $region65: #{tpu_custom_call.1} parent=1 // pred_fallthru
      _
    // Predicated region
    $region66: #{tpu_custom_call.1} parent=1 // pred_check
      _
    $region67: #{tpu_custom_call.1} parent=1 // pred_check_branch
      %132 = sbr.rel (0) target = $region69
    $region68: #{tpu_custom_call.1} parent=1 // pred_region
      %133 = dma.done [#allocation17], 16
    $region69: #{tpu_custom_call.1} parent=1 // pred_fallthru
      _
    %p134 = scmp.eq.s32.totalorder 0, 0
    // Predicated region
    $region70: #{tpu_custom_call.1} parent=1 // pred_check
      %p135 = pneg %p134
    $region71: #{tpu_custom_call.1} parent=1 // pred_check_branch
      %137 = sbr.rel (%p135) target = $region73
    $region72: #{tpu_custom_call.1} parent=1 // pred_region
      %138 = vst [vmem:[#allocation2] sm:$0xff] 0.0
      %139 = vst [vmem:[#allocation2 + $0x8] sm:$0xff] 0.0
      %140 = vst [vmem:[#allocation2 + $0x10] sm:$0xff] 0.0
      %141 = vst [vmem:[#allocation2 + $0x18] sm:$0xff] 0.0
      %142 = vst [vmem:[#allocation2 + $0x20] sm:$0xff] 0.0
      %143 = vst [vmem:[#allocation2 + $0x28] sm:$0xff] 0.0
      %144 = vst [vmem:[#allocation2 + $0x30] sm:$0xff] 0.0
      %145 = vst [vmem:[#allocation2 + $0x38] sm:$0xff] 0.0
      %146 = vst [vmem:[#allocation2 + $0x40] sm:$0xff] 0.0
      %147 = vst [vmem:[#allocation2 + $0x48] sm:$0xff] 0.0
    $region73: #{tpu_custom_call.1} parent=1 // pred_fallthru
      _
    %v148 = vld [vmem:[#allocation4] sm:$0xff]
    %v149 = vld [vmem:[#allocation4 + $0x8] sm:$0xff]
    %v150 = vld [vmem:[#allocation4 + $0x10] sm:$0xff]
    %v151 = vld [vmem:[#allocation4 + $0x18] sm:$0xff]
    %v152 = vld [vmem:[#allocation4 + $0x20] sm:$0xff]
    %v153 = vld [vmem:[#allocation4 + $0x28] sm:$0xff]
    %v154 = vld [vmem:[#allocation4 + $0x30] sm:$0xff]
    %v155 = vld [vmem:[#allocation4 + $0x38] sm:$0xff]
    %v156 = vld [vmem:[#allocation4 + $0x40] sm:$0xff]
    %v157 = vld [vmem:[#allocation4 + $0x48] sm:$0xff]
    %v158 = vld [vmem:[#allocation4 + $0x50] sm:$0xff]
    %v159 = vld [vmem:[#allocation4 + $0x58] sm:$0xff]
    %v160 = vld [vmem:[#allocation4 + $0x60] sm:$0xff]
    %v161 = vld [vmem:[#allocation4 + $0x68] sm:$0xff]
    %v162 = vld [vmem:[#allocation4 + $0x70] sm:$0xff]
    %v163 = vld [vmem:[#allocation4 + $0x78] sm:$0xff]
    %v164 = vld [vmem:[#allocation4 + $0x80] sm:$0xff]
    %v165 = vld [vmem:[#allocation4 + $0x88] sm:$0xff]
    %v166 = vld [vmem:[#allocation4 + $0x90] sm:$0xff]
    %v167 = vld [vmem:[#allocation4 + $0x98] sm:$0xff]
    %v168 = vld [vmem:[#allocation4 + $0xa0] sm:$0xff]
    %v169 = vld [vmem:[#allocation4 + $0xa8] sm:$0xff]
    %v170 = vld [vmem:[#allocation4 + $0xb0] sm:$0xff]
    %v171 = vld [vmem:[#allocation4 + $0xb8] sm:$0xff]
    %v172 = vld [vmem:[#allocation4 + $0xc0] sm:$0xff]
    %v173 = vld [vmem:[#allocation4 + $0xc8] sm:$0xff]
    %v174 = vld [vmem:[#allocation4 + $0xd0] sm:$0xff]
    %v175 = vld [vmem:[#allocation4 + $0xd8] sm:$0xff]
    %v176 = vld [vmem:[#allocation4 + $0xe0] sm:$0xff]
    %v177 = vld [vmem:[#allocation4 + $0xe8] sm:$0xff]
    %v178 = vld [vmem:[#allocation4 + $0xf0] sm:$0xff]
    %v179 = vld [vmem:[#allocation4 + $0xf8] sm:$0xff]
    %v180 = vld [vmem:[#allocation4 + $0x100] sm:$0xff]
    %v181 = vld [vmem:[#allocation4 + $0x108] sm:$0xff]
    %v182 = vld [vmem:[#allocation4 + $0x110] sm:$0xff]
    %v183 = vld [vmem:[#allocation4 + $0x118] sm:$0xff]
    %v184 = vld [vmem:[#allocation4 + $0x120] sm:$0xff]
    %v185 = vld [vmem:[#allocation4 + $0x128] sm:$0xff]
    %v186 = vld [vmem:[#allocation4 + $0x130] sm:$0xff]
    %v187 = vld [vmem:[#allocation4 + $0x138] sm:$0xff]
    %v188 = vld [vmem:[#allocation4 + $0x140] sm:$0xff]
    %v189 = vld [vmem:[#allocation4 + $0x148] sm:$0xff]
    %v190 = vld [vmem:[#allocation4 + $0x150] sm:$0xff]
    %v191 = vld [vmem:[#allocation4 + $0x158] sm:$0xff]
    %v192 = vld [vmem:[#allocation4 + $0x160] sm:$0xff]
    %v193 = vld [vmem:[#allocation4 + $0x168] sm:$0xff]
    %v194 = vld [vmem:[#allocation4 + $0x170] sm:$0xff]
    %v195 = vld [vmem:[#allocation4 + $0x178] sm:$0xff]
    %v196 = vld [vmem:[#allocation4 + $0x180] sm:$0xff]
    %v197 = vld [vmem:[#allocation4 + $0x188] sm:$0xff]
    %v198 = vld [vmem:[#allocation4 + $0x190] sm:$0xff]
    %v199 = vld [vmem:[#allocation4 + $0x198] sm:$0xff]
    %v200 = vld [vmem:[#allocation4 + $0x1a0] sm:$0xff]
    %v201 = vld [vmem:[#allocation4 + $0x1a8] sm:$0xff]
    %v202 = vld [vmem:[#allocation4 + $0x1b0] sm:$0xff]
    %v203 = vld [vmem:[#allocation4 + $0x1b8] sm:$0xff]
    %v204 = vld [vmem:[#allocation4 + $0x1c0] sm:$0xff]
    %v205 = vld [vmem:[#allocation4 + $0x1c8] sm:$0xff]
    %v206 = vld [vmem:[#allocation4 + $0x1d0] sm:$0xff]
    %v207 = vld [vmem:[#allocation4 + $0x1d8] sm:$0xff]
    %v208 = vld [vmem:[#allocation4 + $0x1e0] sm:$0xff]
    %v209 = vld [vmem:[#allocation4 + $0x1e8] sm:$0xff]
    %v210 = vld [vmem:[#allocation4 + $0x1f0] sm:$0xff]
    %v211 = vld [vmem:[#allocation4 + $0x1f8] sm:$0xff]
    %v212 = vld [vmem:[#allocation4 + $0x200] sm:$0xff]
    %v213 = vld [vmem:[#allocation4 + $0x208] sm:$0xff]
    %v214 = vld [vmem:[#allocation4 + $0x210] sm:$0xff]
    %v215 = vld [vmem:[#allocation4 + $0x218] sm:$0xff]
    %v216 = vld [vmem:[#allocation4 + $0x220] sm:$0xff]
    %v217 = vld [vmem:[#allocation4 + $0x228] sm:$0xff]
    %v218 = vld [vmem:[#allocation4 + $0x230] sm:$0xff]
    %v219 = vld [vmem:[#allocation4 + $0x238] sm:$0xff]
    %v220 = vld [vmem:[#allocation4 + $0x240] sm:$0xff]
    %v221 = vld [vmem:[#allocation4 + $0x248] sm:$0xff]
    %v222 = vld [vmem:[#allocation4 + $0x250] sm:$0xff]
    %v223 = vld [vmem:[#allocation4 + $0x258] sm:$0xff]
    %v224 = vld [vmem:[#allocation4 + $0x260] sm:$0xff]
    %v225 = vld [vmem:[#allocation4 + $0x268] sm:$0xff]
    %v226 = vld [vmem:[#allocation4 + $0x270] sm:$0xff]
    %v227 = vld [vmem:[#allocation4 + $0x278] sm:$0xff]
    %v228 = vld [vmem:[#allocation2] sm:$0xff]
    %v229 = vld [vmem:[#allocation2 + $0x8] sm:$0xff]
    %v230 = vld [vmem:[#allocation2 + $0x10] sm:$0xff]
    %v231 = vld [vmem:[#allocation2 + $0x18] sm:$0xff]
    %v232 = vld [vmem:[#allocation2 + $0x20] sm:$0xff]
    %v233 = vld [vmem:[#allocation2 + $0x28] sm:$0xff]
    %v234 = vld [vmem:[#allocation2 + $0x30] sm:$0xff]
    %v235 = vld [vmem:[#allocation2 + $0x38] sm:$0xff]
    %v236 = vld [vmem:[#allocation2 + $0x40] sm:$0xff]
    %v237 = vld [vmem:[#allocation2 + $0x48] sm:$0xff]
    %v238 = vunpack.c.l.bf16 %v148
    %v239 = vunpack.c.h.bf16 %v148
    %v240 = vunpack.c.l.bf16 %v149
    %v241 = vunpack.c.h.bf16 %v149
    %v242 = vunpack.c.l.bf16 %v150
    %v243 = vunpack.c.h.bf16 %v150
    %v244 = vunpack.c.l.bf16 %v151
    %v245 = vunpack.c.h.bf16 %v151
    %v246 = vunpack.c.l.bf16 %v152
    %v247 = vunpack.c.h.bf16 %v152
    %v248 = vunpack.c.l.bf16 %v153
    %v249 = vunpack.c.h.bf16 %v153
    %v250 = vunpack.c.l.bf16 %v154
    %v251 = vunpack.c.h.bf16 %v154
    %v252 = vunpack.c.l.bf16 %v155
    %v253 = vunpack.c.h.bf16 %v155
    %v254 = vunpack.c.l.bf16 %v156
    %v255 = vunpack.c.h.bf16 %v156
    %v256 = vunpack.c.l.bf16 %v157
    %v257 = vunpack.c.h.bf16 %v157
    %v258 = vunpack.c.l.bf16 %v158
    %v259 = vunpack.c.h.bf16 %v158
    %v260 = vunpack.c.l.bf16 %v159
    %v261 = vunpack.c.h.bf16 %v159
    %v262 = vunpack.c.l.bf16 %v160
    %v263 = vunpack.c.h.bf16 %v160
    %v264 = vunpack.c.l.bf16 %v161
    %v265 = vunpack.c.h.bf16 %v161
    %v266 = vunpack.c.l.bf16 %v162
    %v267 = vunpack.c.h.bf16 %v162
    %v268 = vunpack.c.l.bf16 %v163
    %v269 = vunpack.c.h.bf16 %v163
    %v270 = vunpack.c.l.bf16 %v164
    %v271 = vunpack.c.h.bf16 %v164
    %v272 = vunpack.c.l.bf16 %v165
    %v273 = vunpack.c.h.bf16 %v165
    %v274 = vunpack.c.l.bf16 %v166
    %v275 = vunpack.c.h.bf16 %v166
    %v276 = vunpack.c.l.bf16 %v167
    %v277 = vunpack.c.h.bf16 %v167
    %v278 = vunpack.c.l.bf16 %v168
    %v279 = vunpack.c.h.bf16 %v168
    %v280 = vunpack.c.l.bf16 %v169
    %v281 = vunpack.c.h.bf16 %v169
    %v282 = vunpack.c.l.bf16 %v170
    %v283 = vunpack.c.h.bf16 %v170
    %v284 = vunpack.c.l.bf16 %v171
    %v285 = vunpack.c.h.bf16 %v171
    %v286 = vunpack.c.l.bf16 %v172
    %v287 = vunpack.c.h.bf16 %v172
    %v288 = vunpack.c.l.bf16 %v173
    %v289 = vunpack.c.h.bf16 %v173
    %v290 = vunpack.c.l.bf16 %v174
    %v291 = vunpack.c.h.bf16 %v174
    %v292 = vunpack.c.l.bf16 %v175
    %v293 = vunpack.c.h.bf16 %v175
    %v294 = vunpack.c.l.bf16 %v176
    %v295 = vunpack.c.h.bf16 %v176
    %v296 = vunpack.c.l.bf16 %v177
    %v297 = vunpack.c.h.bf16 %v177
    %v298 = vunpack.c.l.bf16 %v178
    %v299 = vunpack.c.h.bf16 %v178
    %v300 = vunpack.c.l.bf16 %v179
    %v301 = vunpack.c.h.bf16 %v179
    %v302 = vunpack.c.l.bf16 %v180
    %v303 = vunpack.c.h.bf16 %v180
    %v304 = vunpack.c.l.bf16 %v181
    %v305 = vunpack.c.h.bf16 %v181
    %v306 = vunpack.c.l.bf16 %v182
    %v307 = vunpack.c.h.bf16 %v182
    %v308 = vunpack.c.l.bf16 %v183
    %v309 = vunpack.c.h.bf16 %v183
    %v310 = vunpack.c.l.bf16 %v184
    %v311 = vunpack.c.h.bf16 %v184
    %v312 = vunpack.c.l.bf16 %v185
    %v313 = vunpack.c.h.bf16 %v185
    %v314 = vunpack.c.l.bf16 %v186
    %v315 = vunpack.c.h.bf16 %v186
    %v316 = vunpack.c.l.bf16 %v187
    %v317 = vunpack.c.h.bf16 %v187
    %v318 = vunpack.c.l.bf16 %v188
    %v319 = vunpack.c.h.bf16 %v188
    %v320 = vunpack.c.l.bf16 %v189
    %v321 = vunpack.c.h.bf16 %v189
    %v322 = vunpack.c.l.bf16 %v190
    %v323 = vunpack.c.h.bf16 %v190
    %v324 = vunpack.c.l.bf16 %v191
    %v325 = vunpack.c.h.bf16 %v191
    %v326 = vunpack.c.l.bf16 %v192
    %v327 = vunpack.c.h.bf16 %v192
    %v328 = vunpack.c.l.bf16 %v193
    %v329 = vunpack.c.h.bf16 %v193
    %v330 = vunpack.c.l.bf16 %v194
    %v331 = vunpack.c.h.bf16 %v194
    %v332 = vunpack.c.l.bf16 %v195
    %v333 = vunpack.c.h.bf16 %v195
    %v334 = vunpack.c.l.bf16 %v196
    %v335 = vunpack.c.h.bf16 %v196
    %v336 = vunpack.c.l.bf16 %v197
    %v337 = vunpack.c.h.bf16 %v197
    %v338 = vunpack.c.l.bf16 %v198
    %v339 = vunpack.c.h.bf16 %v198
    %v340 = vunpack.c.l.bf16 %v199
    %v341 = vunpack.c.h.bf16 %v199
    %v342 = vunpack.c.l.bf16 %v200
    %v343 = vunpack.c.h.bf16 %v200
    %v344 = vunpack.c.l.bf16 %v201
    %v345 = vunpack.c.h.bf16 %v201
    %v346 = vunpack.c.l.bf16 %v202
    %v347 = vunpack.c.h.bf16 %v202
    %v348 = vunpack.c.l.bf16 %v203
    %v349 = vunpack.c.h.bf16 %v203
    %v350 = vunpack.c.l.bf16 %v204
    %v351 = vunpack.c.h.bf16 %v204
    %v352 = vunpack.c.l.bf16 %v205
    %v353 = vunpack.c.h.bf16 %v205
    %v354 = vunpack.c.l.bf16 %v206
    %v355 = vunpack.c.h.bf16 %v206
    %v356 = vunpack.c.l.bf16 %v207
    %v357 = vunpack.c.h.bf16 %v207
    %v358 = vunpack.c.l.bf16 %v208
    %v359 = vunpack.c.h.bf16 %v208
    %v360 = vunpack.c.l.bf16 %v209
    %v361 = vunpack.c.h.bf16 %v209
    %v362 = vunpack.c.l.bf16 %v210
    %v363 = vunpack.c.h.bf16 %v210
    %v364 = vunpack.c.l.bf16 %v211
    %v365 = vunpack.c.h.bf16 %v211
    %v366 = vunpack.c.l.bf16 %v212
    %v367 = vunpack.c.h.bf16 %v212
    %v368 = vunpack.c.l.bf16 %v213
    %v369 = vunpack.c.h.bf16 %v213
    %v370 = vunpack.c.l.bf16 %v214
    %v371 = vunpack.c.h.bf16 %v214
    %v372 = vunpack.c.l.bf16 %v215
    %v373 = vunpack.c.h.bf16 %v215
    %v374 = vunpack.c.l.bf16 %v216
    %v375 = vunpack.c.h.bf16 %v216
    %v376 = vunpack.c.l.bf16 %v217
    %v377 = vunpack.c.h.bf16 %v217
    %v378 = vunpack.c.l.bf16 %v218
    %v379 = vunpack.c.h.bf16 %v218
    %v380 = vunpack.c.l.bf16 %v219
    %v381 = vunpack.c.h.bf16 %v219
    %v382 = vunpack.c.l.bf16 %v220
    %v383 = vunpack.c.h.bf16 %v220
    %v384 = vunpack.c.l.bf16 %v221
    %v385 = vunpack.c.h.bf16 %v221
    %v386 = vunpack.c.l.bf16 %v222
    %v387 = vunpack.c.h.bf16 %v222
    %v388 = vunpack.c.l.bf16 %v223
    %v389 = vunpack.c.h.bf16 %v223
    %v390 = vunpack.c.l.bf16 %v224
    %v391 = vunpack.c.h.bf16 %v224
    %v392 = vunpack.c.l.bf16 %v225
    %v393 = vunpack.c.h.bf16 %v225
    %v394 = vunpack.c.l.bf16 %v226
    %v395 = vunpack.c.h.bf16 %v226
    %v396 = vunpack.c.l.bf16 %v227
    %v397 = vunpack.c.h.bf16 %v227
    %v398 = vadd.f32 %v238, %v248
    %v399 = vrot.slane %v398, 4
    %v400 = vadd.f32 %v398, %v399
    %v401 = vrot.slane %v400, 2
    %v402 = vadd.f32 %v400, %v401
    %v403 = vrot.slane %v402, 1
    %v404 = vadd.f32 %v402, %v403
    %v405 = vadd.f32 %v239, %v249
    %v406 = vrot.slane %v405, 4
    %v407 = vadd.f32 %v405, %v406
    %v408 = vrot.slane %v407, 2
    %v409 = vadd.f32 %v407, %v408
    %v410 = vrot.slane %v409, 1
    %v411 = vadd.f32 %v409, %v410
    %v412 = vadd.f32 %v240, %v250
    %v413 = vrot.slane %v412, 4
    %v414 = vadd.f32 %v412, %v413
    %v415 = vrot.slane %v414, 2
    %v416 = vadd.f32 %v414, %v415
    %v417 = vrot.slane %v416, 1
    %v418 = vadd.f32 %v416, %v417
    %v419 = vadd.f32 %v241, %v251
    %v420 = vrot.slane %v419, 4
    %v421 = vadd.f32 %v419, %v420
    %v422 = vrot.slane %v421, 2
    %v423 = vadd.f32 %v421, %v422
    %v424 = vrot.slane %v423, 1
    %v425 = vadd.f32 %v423, %v424
    %v426 = vadd.f32 %v242, %v252
    %v427 = vrot.slane %v426, 4
    %v428 = vadd.f32 %v426, %v427
    %v429 = vrot.slane %v428, 2
    %v430 = vadd.f32 %v428, %v429
    %v431 = vrot.slane %v430, 1
    %v432 = vadd.f32 %v430, %v431
    %v433 = vadd.f32 %v243, %v253
    %v434 = vrot.slane %v433, 4
    %v435 = vadd.f32 %v433, %v434
    %v436 = vrot.slane %v435, 2
    %v437 = vadd.f32 %v435, %v436
    %v438 = vrot.slane %v437, 1
    %v439 = vadd.f32 %v437, %v438
    %v440 = vadd.f32 %v244, %v254
    %v441 = vrot.slane %v440, 4
    %v442 = vadd.f32 %v440, %v441
    %v443 = vrot.slane %v442, 2
    %v444 = vadd.f32 %v442, %v443
    %v445 = vrot.slane %v444, 1
    %v446 = vadd.f32 %v444, %v445
    %v447 = vadd.f32 %v245, %v255
    %v448 = vrot.slane %v447, 4
    %v449 = vadd.f32 %v447, %v448
    %v450 = vrot.slane %v449, 2
    %v451 = vadd.f32 %v449, %v450
    %v452 = vrot.slane %v451, 1
    %v453 = vadd.f32 %v451, %v452
    %v454 = vadd.f32 %v246, %v256
    %v455 = vrot.slane %v454, 4
    %v456 = vadd.f32 %v454, %v455
    %v457 = vrot.slane %v456, 2
    %v458 = vadd.f32 %v456, %v457
    %v459 = vrot.slane %v458, 1
    %v460 = vadd.f32 %v458, %v459
    %v461 = vadd.f32 %v247, %v257
    %v462 = vrot.slane %v461, 4
    %v463 = vadd.f32 %v461, %v462
    %v464 = vrot.slane %v463, 2
    %v465 = vadd.f32 %v463, %v464
    %v466 = vrot.slane %v465, 1
    %v467 = vadd.f32 %v465, %v466
    %v468 = vadd.f32 %v258, %v268
    %v469 = vrot.slane %v468, 4
    %v470 = vadd.f32 %v468, %v469
    %v471 = vrot.slane %v470, 2
    %v472 = vadd.f32 %v470, %v471
    %v473 = vrot.slane %v472, 1
    %v474 = vadd.f32 %v472, %v473
    %v475 = vadd.f32 %v259, %v269
    %v476 = vrot.slane %v475, 4
    %v477 = vadd.f32 %v475, %v476
    %v478 = vrot.slane %v477, 2
    %v479 = vadd.f32 %v477, %v478
    %v480 = vrot.slane %v479, 1
    %v481 = vadd.f32 %v479, %v480
    %v482 = vadd.f32 %v260, %v270
    %v483 = vrot.slane %v482, 4
    %v484 = vadd.f32 %v482, %v483
    %v485 = vrot.slane %v484, 2
    %v486 = vadd.f32 %v484, %v485
    %v487 = vrot.slane %v486, 1
    %v488 = vadd.f32 %v486, %v487
    %v489 = vadd.f32 %v261, %v271
    %v490 = vrot.slane %v489, 4
    %v491 = vadd.f32 %v489, %v490
    %v492 = vrot.slane %v491, 2
    %v493 = vadd.f32 %v491, %v492
    %v494 = vrot.slane %v493, 1
    %v495 = vadd.f32 %v493, %v494
    %v496 = vadd.f32 %v262, %v272
    %v497 = vrot.slane %v496, 4
    %v498 = vadd.f32 %v496, %v497
    %v499 = vrot.slane %v498, 2
    %v500 = vadd.f32 %v498, %v499
    %v501 = vrot.slane %v500, 1
    %v502 = vadd.f32 %v500, %v501
    %v503 = vadd.f32 %v263, %v273
    %v504 = vrot.slane %v503, 4
    %v505 = vadd.f32 %v503, %v504
    %v506 = vrot.slane %v505, 2
    %v507 = vadd.f32 %v505, %v506
    %v508 = vrot.slane %v507, 1
    %v509 = vadd.f32 %v507, %v508
    %v510 = vadd.f32 %v264, %v274
    %v511 = vrot.slane %v510, 4
    %v512 = vadd.f32 %v510, %v511
    %v513 = vrot.slane %v512, 2
    %v514 = vadd.f32 %v512, %v513
    %v515 = vrot.slane %v514, 1
    %v516 = vadd.f32 %v514, %v515
    %v517 = vadd.f32 %v265, %v275
    %v518 = vrot.slane %v517, 4
    %v519 = vadd.f32 %v517, %v518
    %v520 = vrot.slane %v519, 2
    %v521 = vadd.f32 %v519, %v520
    %v522 = vrot.slane %v521, 1
    %v523 = vadd.f32 %v521, %v522
    %v524 = vadd.f32 %v266, %v276
    %v525 = vrot.slane %v524, 4
    %v526 = vadd.f32 %v524, %v525
    %v527 = vrot.slane %v526, 2
    %v528 = vadd.f32 %v526, %v527
    %v529 = vrot.slane %v528, 1
    %v530 = vadd.f32 %v528, %v529
    %v531 = vadd.f32 %v267, %v277
    %v532 = vrot.slane %v531, 4
    %v533 = vadd.f32 %v531, %v532
    %v534 = vrot.slane %v533, 2
    %v535 = vadd.f32 %v533, %v534
    %v536 = vrot.slane %v535, 1
    %v537 = vadd.f32 %v535, %v536
    %v538 = vadd.f32 %v278, %v288
    %v539 = vrot.slane %v538, 4
    %v540 = vadd.f32 %v538, %v539
    %v541 = vrot.slane %v540, 2
    %v542 = vadd.f32 %v540, %v541
    %v543 = vrot.slane %v542, 1
    %v544 = vadd.f32 %v542, %v543
    %v545 = vadd.f32 %v279, %v289
    %v546 = vrot.slane %v545, 4
    %v547 = vadd.f32 %v545, %v546
    %v548 = vrot.slane %v547, 2
    %v549 = vadd.f32 %v547, %v548
    %v550 = vrot.slane %v549, 1
    %v551 = vadd.f32 %v549, %v550
    %v552 = vadd.f32 %v280, %v290
    %v553 = vrot.slane %v552, 4
    %v554 = vadd.f32 %v552, %v553
    %v555 = vrot.slane %v554, 2
    %v556 = vadd.f32 %v554, %v555
    %v557 = vrot.slane %v556, 1
    %v558 = vadd.f32 %v556, %v557
    %v559 = vadd.f32 %v281, %v291
    %v560 = vrot.slane %v559, 4
    %v561 = vadd.f32 %v559, %v560
    %v562 = vrot.slane %v561, 2
    %v563 = vadd.f32 %v561, %v562
    %v564 = vrot.slane %v563, 1
    %v565 = vadd.f32 %v563, %v564
    %v566 = vadd.f32 %v282, %v292
    %v567 = vrot.slane %v566, 4
    %v568 = vadd.f32 %v566, %v567
    %v569 = vrot.slane %v568, 2
    %v570 = vadd.f32 %v568, %v569
    %v571 = vrot.slane %v570, 1
    %v572 = vadd.f32 %v570, %v571
    %v573 = vadd.f32 %v283, %v293
    %v574 = vrot.slane %v573, 4
    %v575 = vadd.f32 %v573, %v574
    %v576 = vrot.slane %v575, 2
    %v577 = vadd.f32 %v575, %v576
    %v578 = vrot.slane %v577, 1
    %v579 = vadd.f32 %v577, %v578
    %v580 = vadd.f32 %v284, %v294
    %v581 = vrot.slane %v580, 4
    %v582 = vadd.f32 %v580, %v581
    %v583 = vrot.slane %v582, 2
    %v584 = vadd.f32 %v582, %v583
    %v585 = vrot.slane %v584, 1
    %v586 = vadd.f32 %v584, %v585
    %v587 = vadd.f32 %v285, %v295
    %v588 = vrot.slane %v587, 4
    %v589 = vadd.f32 %v587, %v588
    %v590 = vrot.slane %v589, 2
    %v591 = vadd.f32 %v589, %v590
    %v592 = vrot.slane %v591, 1
    %v593 = vadd.f32 %v591, %v592
    %v594 = vadd.f32 %v286, %v296
    %v595 = vrot.slane %v594, 4
    %v596 = vadd.f32 %v594, %v595
    %v597 = vrot.slane %v596, 2
    %v598 = vadd.f32 %v596, %v597
    %v599 = vrot.slane %v598, 1
    %v600 = vadd.f32 %v598, %v599
    %v601 = vadd.f32 %v287, %v297
    %v602 = vrot.slane %v601, 4
    %v603 = vadd.f32 %v601, %v602
    %v604 = vrot.slane %v603, 2
    %v605 = vadd.f32 %v603, %v604
    %v606 = vrot.slane %v605, 1
    %v607 = vadd.f32 %v605, %v606
    %v608 = vadd.f32 %v298, %v308
    %v609 = vrot.slane %v608, 4
    %v610 = vadd.f32 %v608, %v609
    %v611 = vrot.slane %v610, 2
    %v612 = vadd.f32 %v610, %v611
    %v613 = vrot.slane %v612, 1
    %v614 = vadd.f32 %v612, %v613
    %v615 = vadd.f32 %v299, %v309
    %v616 = vrot.slane %v615, 4
    %v617 = vadd.f32 %v615, %v616
    %v618 = vrot.slane %v617, 2
    %v619 = vadd.f32 %v617, %v618
    %v620 = vrot.slane %v619, 1
    %v621 = vadd.f32 %v619, %v620
    %v622 = vadd.f32 %v300, %v310
    %v623 = vrot.slane %v622, 4
    %v624 = vadd.f32 %v622, %v623
    %v625 = vrot.slane %v624, 2
    %v626 = vadd.f32 %v624, %v625
    %v627 = vrot.slane %v626, 1
    %v628 = vadd.f32 %v626, %v627
    %v629 = vadd.f32 %v301, %v311
    %v630 = vrot.slane %v629, 4
    %v631 = vadd.f32 %v629, %v630
    %v632 = vrot.slane %v631, 2
    %v633 = vadd.f32 %v631, %v632
    %v634 = vrot.slane %v633, 1
    %v635 = vadd.f32 %v633, %v634
    %v636 = vadd.f32 %v302, %v312
    %v637 = vrot.slane %v636, 4
    %v638 = vadd.f32 %v636, %v637
    %v639 = vrot.slane %v638, 2
    %v640 = vadd.f32 %v638, %v639
    %v641 = vrot.slane %v640, 1
    %v642 = vadd.f32 %v640, %v641
    %v643 = vadd.f32 %v303, %v313
    %v644 = vrot.slane %v643, 4
    %v645 = vadd.f32 %v643, %v644
    %v646 = vrot.slane %v645, 2
    %v647 = vadd.f32 %v645, %v646
    %v648 = vrot.slane %v647, 1
    %v649 = vadd.f32 %v647, %v648
    %v650 = vadd.f32 %v304, %v314
    %v651 = vrot.slane %v650, 4
    %v652 = vadd.f32 %v650, %v651
    %v653 = vrot.slane %v652, 2
    %v654 = vadd.f32 %v652, %v653
    %v655 = vrot.slane %v654, 1
    %v656 = vadd.f32 %v654, %v655
    %v657 = vadd.f32 %v305, %v315
    %v658 = vrot.slane %v657, 4
    %v659 = vadd.f32 %v657, %v658
    %v660 = vrot.slane %v659, 2
    %v661 = vadd.f32 %v659, %v660
    %v662 = vrot.slane %v661, 1
    %v663 = vadd.f32 %v661, %v662
    %v664 = vadd.f32 %v306, %v316
    %v665 = vrot.slane %v664, 4
    %v666 = vadd.f32 %v664, %v665
    %v667 = vrot.slane %v666, 2
    %v668 = vadd.f32 %v666, %v667
    %v669 = vrot.slane %v668, 1
    %v670 = vadd.f32 %v668, %v669
    %v671 = vadd.f32 %v307, %v317
    %v672 = vrot.slane %v671, 4
    %v673 = vadd.f32 %v671, %v672
    %v674 = vrot.slane %v673, 2
    %v675 = vadd.f32 %v673, %v674
    %v676 = vrot.slane %v675, 1
    %v677 = vadd.f32 %v675, %v676
    %v678 = vadd.f32 %v318, %v328
    %v679 = vrot.slane %v678, 4
    %v680 = vadd.f32 %v678, %v679
    %v681 = vrot.slane %v680, 2
    %v682 = vadd.f32 %v680, %v681
    %v683 = vrot.slane %v682, 1
    %v684 = vadd.f32 %v682, %v683
    %v685 = vadd.f32 %v319, %v329
    %v686 = vrot.slane %v685, 4
    %v687 = vadd.f32 %v685, %v686
    %v688 = vrot.slane %v687, 2
    %v689 = vadd.f32 %v687, %v688
    %v690 = vrot.slane %v689, 1
    %v691 = vadd.f32 %v689, %v690
    %v692 = vadd.f32 %v320, %v330
    %v693 = vrot.slane %v692, 4
    %v694 = vadd.f32 %v692, %v693
    %v695 = vrot.slane %v694, 2
    %v696 = vadd.f32 %v694, %v695
    %v697 = vrot.slane %v696, 1
    %v698 = vadd.f32 %v696, %v697
    %v699 = vadd.f32 %v321, %v331
    %v700 = vrot.slane %v699, 4
    %v701 = vadd.f32 %v699, %v700
    %v702 = vrot.slane %v701, 2
    %v703 = vadd.f32 %v701, %v702
    %v704 = vrot.slane %v703, 1
    %v705 = vadd.f32 %v703, %v704
    %v706 = vadd.f32 %v322, %v332
    %v707 = vrot.slane %v706, 4
    %v708 = vadd.f32 %v706, %v707
    %v709 = vrot.slane %v708, 2
    %v710 = vadd.f32 %v708, %v709
    %v711 = vrot.slane %v710, 1
    %v712 = vadd.f32 %v710, %v711
    %v713 = vadd.f32 %v323, %v333
    %v714 = vrot.slane %v713, 4
    %v715 = vadd.f32 %v713, %v714
    %v716 = vrot.slane %v715, 2
    %v717 = vadd.f32 %v715, %v716
    %v718 = vrot.slane %v717, 1
    %v719 = vadd.f32 %v717, %v718
    %v720 = vadd.f32 %v324, %v334
    %v721 = vrot.slane %v720, 4
    %v722 = vadd.f32 %v720, %v721
    %v723 = vrot.slane %v722, 2
    %v724 = vadd.f32 %v722, %v723
    %v725 = vrot.slane %v724, 1
    %v726 = vadd.f32 %v724, %v725
    %v727 = vadd.f32 %v325, %v335
    %v728 = vrot.slane %v727, 4
    %v729 = vadd.f32 %v727, %v728
    %v730 = vrot.slane %v729, 2
    %v731 = vadd.f32 %v729, %v730
    %v732 = vrot.slane %v731, 1
    %v733 = vadd.f32 %v731, %v732
    %v734 = vadd.f32 %v326, %v336
    %v735 = vrot.slane %v734, 4
    %v736 = vadd.f32 %v734, %v735
    %v737 = vrot.slane %v736, 2
    %v738 = vadd.f32 %v736, %v737
    %v739 = vrot.slane %v738, 1
    %v740 = vadd.f32 %v738, %v739
    %v741 = vadd.f32 %v327, %v337
    %v742 = vrot.slane %v741, 4
    %v743 = vadd.f32 %v741, %v742
    %v744 = vrot.slane %v743, 2
    %v745 = vadd.f32 %v743, %v744
    %v746 = vrot.slane %v745, 1
    %v747 = vadd.f32 %v745, %v746
    %v748 = vadd.f32 %v338, %v348
    %v749 = vrot.slane %v748, 4
    %v750 = vadd.f32 %v748, %v749
    %v751 = vrot.slane %v750, 2
    %v752 = vadd.f32 %v750, %v751
    %v753 = vrot.slane %v752, 1
    %v754 = vadd.f32 %v752, %v753
    %v755 = vadd.f32 %v339, %v349
    %v756 = vrot.slane %v755, 4
    %v757 = vadd.f32 %v755, %v756
    %v758 = vrot.slane %v757, 2
    %v759 = vadd.f32 %v757, %v758
    %v760 = vrot.slane %v759, 1
    %v761 = vadd.f32 %v759, %v760
    %v762 = vadd.f32 %v340, %v350
    %v763 = vrot.slane %v762, 4
    %v764 = vadd.f32 %v762, %v763
    %v765 = vrot.slane %v764, 2
    %v766 = vadd.f32 %v764, %v765
    %v767 = vrot.slane %v766, 1
    %v768 = vadd.f32 %v766, %v767
    %v769 = vadd.f32 %v341, %v351
    %v770 = vrot.slane %v769, 4
    %v771 = vadd.f32 %v769, %v770
    %v772 = vrot.slane %v771, 2
    %v773 = vadd.f32 %v771, %v772
    %v774 = vrot.slane %v773, 1
    %v775 = vadd.f32 %v773, %v774
    %v776 = vadd.f32 %v342, %v352
    %v777 = vrot.slane %v776, 4
    %v778 = vadd.f32 %v776, %v777
    %v779 = vrot.slane %v778, 2
    %v780 = vadd.f32 %v778, %v779
    %v781 = vrot.slane %v780, 1
    %v782 = vadd.f32 %v780, %v781
    %v783 = vadd.f32 %v343, %v353
    %v784 = vrot.slane %v783, 4
    %v785 = vadd.f32 %v783, %v784
    %v786 = vrot.slane %v785, 2
    %v787 = vadd.f32 %v785, %v786
    %v788 = vrot.slane %v787, 1
    %v789 = vadd.f32 %v787, %v788
    %v790 = vadd.f32 %v344, %v354
    %v791 = vrot.slane %v790, 4
    %v792 = vadd.f32 %v790, %v791
    %v793 = vrot.slane %v792, 2
    %v794 = vadd.f32 %v792, %v793
    %v795 = vrot.slane %v794, 1
    %v796 = vadd.f32 %v794, %v795
    %v797 = vadd.f32 %v345, %v355
    %v798 = vrot.slane %v797, 4
    %v799 = vadd.f32 %v797, %v798
    %v800 = vrot.slane %v799, 2
    %v801 = vadd.f32 %v799, %v800
    %v802 = vrot.slane %v801, 1
    %v803 = vadd.f32 %v801, %v802
    %v804 = vadd.f32 %v346, %v356
    %v805 = vrot.slane %v804, 4
    %v806 = vadd.f32 %v804, %v805
    %v807 = vrot.slane %v806, 2
    %v808 = vadd.f32 %v806, %v807
    %v809 = vrot.slane %v808, 1
    %v810 = vadd.f32 %v808, %v809
    %v811 = vadd.f32 %v347, %v357
    %v812 = vrot.slane %v811, 4
    %v813 = vadd.f32 %v811, %v812
    %v814 = vrot.slane %v813, 2
    %v815 = vadd.f32 %v813, %v814
    %v816 = vrot.slane %v815, 1
    %v817 = vadd.f32 %v815, %v816
    %v818 = vadd.f32 %v358, %v368
    %v819 = vrot.slane %v818, 4
    %v820 = vadd.f32 %v818, %v819
    %v821 = vrot.slane %v820, 2
    %v822 = vadd.f32 %v820, %v821
    %v823 = vrot.slane %v822, 1
    %v824 = vadd.f32 %v822, %v823
    %v825 = vadd.f32 %v359, %v369
    %v826 = vrot.slane %v825, 4
    %v827 = vadd.f32 %v825, %v826
    %v828 = vrot.slane %v827, 2
    %v829 = vadd.f32 %v827, %v828
    %v830 = vrot.slane %v829, 1
    %v831 = vadd.f32 %v829, %v830
    %v832 = vadd.f32 %v360, %v370
    %v833 = vrot.slane %v832, 4
    %v834 = vadd.f32 %v832, %v833
    %v835 = vrot.slane %v834, 2
    %v836 = vadd.f32 %v834, %v835
    %v837 = vrot.slane %v836, 1
    %v838 = vadd.f32 %v836, %v837
    %v839 = vadd.f32 %v361, %v371
    %v840 = vrot.slane %v839, 4
    %v841 = vadd.f32 %v839, %v840
    %v842 = vrot.slane %v841, 2
    %v843 = vadd.f32 %v841, %v842
    %v844 = vrot.slane %v843, 1
    %v845 = vadd.f32 %v843, %v844
    %v846 = vadd.f32 %v362, %v372
    %v847 = vrot.slane %v846, 4
    %v848 = vadd.f32 %v846, %v847
    %v849 = vrot.slane %v848, 2
    %v850 = vadd.f32 %v848, %v849
    %v851 = vrot.slane %v850, 1
    %v852 = vadd.f32 %v850, %v851
    %v853 = vadd.f32 %v363, %v373
    %v854 = vrot.slane %v853, 4
    %v855 = vadd.f32 %v853, %v854
    %v856 = vrot.slane %v855, 2
    %v857 = vadd.f32 %v855, %v856
    %v858 = vrot.slane %v857, 1
    %v859 = vadd.f32 %v857, %v858
    %v860 = vadd.f32 %v364, %v374
    %v861 = vrot.slane %v860, 4
    %v862 = vadd.f32 %v860, %v861
    %v863 = vrot.slane %v862, 2
    %v864 = vadd.f32 %v862, %v863
    %v865 = vrot.slane %v864, 1
    %v866 = vadd.f32 %v864, %v865
    %v867 = vadd.f32 %v365, %v375
    %v868 = vrot.slane %v867, 4
    %v869 = vadd.f32 %v867, %v868
    %v870 = vrot.slane %v869, 2
    %v871 = vadd.f32 %v869, %v870
    %v872 = vrot.slane %v871, 1
    %v873 = vadd.f32 %v871, %v872
    %v874 = vadd.f32 %v366, %v376
    %v875 = vrot.slane %v874, 4
    %v876 = vadd.f32 %v874, %v875
    %v877 = vrot.slane %v876, 2
    %v878 = vadd.f32 %v876, %v877
    %v879 = vrot.slane %v878, 1
    %v880 = vadd.f32 %v878, %v879
    %v881 = vadd.f32 %v367, %v377
    %v882 = vrot.slane %v881, 4
    %v883 = vadd.f32 %v881, %v882
    %v884 = vrot.slane %v883, 2
    %v885 = vadd.f32 %v883, %v884
    %v886 = vrot.slane %v885, 1
    %v887 = vadd.f32 %v885, %v886
    %v888 = vadd.f32 %v378, %v388
    %v889 = vrot.slane %v888, 4
    %v890 = vadd.f32 %v888, %v889
    %v891 = vrot.slane %v890, 2
    %v892 = vadd.f32 %v890, %v891
    %v893 = vrot.slane %v892, 1
    %v894 = vadd.f32 %v892, %v893
    %v895 = vadd.f32 %v379, %v389
    %v896 = vrot.slane %v895, 4
    %v897 = vadd.f32 %v895, %v896
    %v898 = vrot.slane %v897, 2
    %v899 = vadd.f32 %v897, %v898
    %v900 = vrot.slane %v899, 1
    %v901 = vadd.f32 %v899, %v900
    %v902 = vadd.f32 %v380, %v390
    %v903 = vrot.slane %v902, 4
    %v904 = vadd.f32 %v902, %v903
    %v905 = vrot.slane %v904, 2
    %v906 = vadd.f32 %v904, %v905
    %v907 = vrot.slane %v906, 1
    %v908 = vadd.f32 %v906, %v907
    %v909 = vadd.f32 %v381, %v391
    %v910 = vrot.slane %v909, 4
    %v911 = vadd.f32 %v909, %v910
    %v912 = vrot.slane %v911, 2
    %v913 = vadd.f32 %v911, %v912
    %v914 = vrot.slane %v913, 1
    %v915 = vadd.f32 %v913, %v914
    %v916 = vadd.f32 %v382, %v392
    %v917 = vrot.slane %v916, 4
    %v918 = vadd.f32 %v916, %v917
    %v919 = vrot.slane %v918, 2
    %v920 = vadd.f32 %v918, %v919
    %v921 = vrot.slane %v920, 1
    %v922 = vadd.f32 %v920, %v921
    %v923 = vadd.f32 %v383, %v393
    %v924 = vrot.slane %v923, 4
    %v925 = vadd.f32 %v923, %v924
    %v926 = vrot.slane %v925, 2
    %v927 = vadd.f32 %v925, %v926
    %v928 = vrot.slane %v927, 1
    %v929 = vadd.f32 %v927, %v928
    %v930 = vadd.f32 %v384, %v394
    %v931 = vrot.slane %v930, 4
    %v932 = vadd.f32 %v930, %v931
    %v933 = vrot.slane %v932, 2
    %v934 = vadd.f32 %v932, %v933
    %v935 = vrot.slane %v934, 1
    %v936 = vadd.f32 %v934, %v935
    %v937 = vadd.f32 %v385, %v395
    %v938 = vrot.slane %v937, 4
    %v939 = vadd.f32 %v937, %v938
    %v940 = vrot.slane %v939, 2
    %v941 = vadd.f32 %v939, %v940
    %v942 = vrot.slane %v941, 1
    %v943 = vadd.f32 %v941, %v942
    %v944 = vadd.f32 %v386, %v396
    %v945 = vrot.slane %v944, 4
    %v946 = vadd.f32 %v944, %v945
    %v947 = vrot.slane %v946, 2
    %v948 = vadd.f32 %v946, %v947
    %v949 = vrot.slane %v948, 1
    %v950 = vadd.f32 %v948, %v949
    %v951 = vadd.f32 %v387, %v397
    %v952 = vrot.slane %v951, 4
    %v953 = vadd.f32 %v951, %v952
    %v954 = vrot.slane %v953, 2
    %v955 = vadd.f32 %v953, %v954
    %v956 = vrot.slane %v955, 1
    %v957 = vadd.f32 %v955, %v956
    %vm1038 = vcmask 1041409
    %v1039 = vsel %vm1038, %v474, %v404
    %vm1040 = vcmask 1042434
    %v1041 = vsel %vm1040, %v544, %v1039
    %vm1042 = vcmask 1043459
    %v1043 = vsel %vm1042, %v614, %v1041
    %vm1044 = vcmask 1044484
    %v1045 = vsel %vm1044, %v684, %v1043
    %vm1046 = vcmask 1045509
    %v1047 = vsel %vm1046, %v754, %v1045
    %vm1048 = vcmask 1046534
    %v1049 = vsel %vm1048, %v824, %v1047
    %vm1050 = vcmask 1047559
    %v1051 = vsel %vm1050, %v894, %v1049
    %v1052 = vsel %vm1038, %v481, %v411
    %v1053 = vsel %vm1040, %v551, %v1052
    %v1054 = vsel %vm1042, %v621, %v1053
    %v1055 = vsel %vm1044, %v691, %v1054
    %v1056 = vsel %vm1046, %v761, %v1055
    %v1057 = vsel %vm1048, %v831, %v1056
    %v1058 = vsel %vm1050, %v901, %v1057
    %v1059 = vsel %vm1038, %v488, %v418
    %v1060 = vsel %vm1040, %v558, %v1059
    %v1061 = vsel %vm1042, %v628, %v1060
    %v1062 = vsel %vm1044, %v698, %v1061
    %v1063 = vsel %vm1046, %v768, %v1062
    %v1064 = vsel %vm1048, %v838, %v1063
    %v1065 = vsel %vm1050, %v908, %v1064
    %v1066 = vsel %vm1038, %v495, %v425
    %v1067 = vsel %vm1040, %v565, %v1066
    %v1068 = vsel %vm1042, %v635, %v1067
    %v1069 = vsel %vm1044, %v705, %v1068
    %v1070 = vsel %vm1046, %v775, %v1069
    %v1071 = vsel %vm1048, %v845, %v1070
    %v1072 = vsel %vm1050, %v915, %v1071
    %v1073 = vsel %vm1038, %v502, %v432
    %v1074 = vsel %vm1040, %v572, %v1073
    %v1075 = vsel %vm1042, %v642, %v1074
    %v1076 = vsel %vm1044, %v712, %v1075
    %v1077 = vsel %vm1046, %v782, %v1076
    %v1078 = vsel %vm1048, %v852, %v1077
    %v1079 = vsel %vm1050, %v922, %v1078
    %v1080 = vsel %vm1038, %v509, %v439
    %v1081 = vsel %vm1040, %v579, %v1080
    %v1082 = vsel %vm1042, %v649, %v1081
    %v1083 = vsel %vm1044, %v719, %v1082
    %v1084 = vsel %vm1046, %v789, %v1083
    %v1085 = vsel %vm1048, %v859, %v1084
    %v1086 = vsel %vm1050, %v929, %v1085
    %v1087 = vsel %vm1038, %v516, %v446
    %v1088 = vsel %vm1040, %v586, %v1087
    %v1089 = vsel %vm1042, %v656, %v1088
    %v1090 = vsel %vm1044, %v726, %v1089
    %v1091 = vsel %vm1046, %v796, %v1090
    %v1092 = vsel %vm1048, %v866, %v1091
    %v1093 = vsel %vm1050, %v936, %v1092
    %v1094 = vsel %vm1038, %v523, %v453
    %v1095 = vsel %vm1040, %v593, %v1094
    %v1096 = vsel %vm1042, %v663, %v1095
    %v1097 = vsel %vm1044, %v733, %v1096
    %v1098 = vsel %vm1046, %v803, %v1097
    %v1099 = vsel %vm1048, %v873, %v1098
    %v1100 = vsel %vm1050, %v943, %v1099
    %v1101 = vsel %vm1038, %v530, %v460
    %v1102 = vsel %vm1040, %v600, %v1101
    %v1103 = vsel %vm1042, %v670, %v1102
    %v1104 = vsel %vm1044, %v740, %v1103
    %v1105 = vsel %vm1046, %v810, %v1104
    %v1106 = vsel %vm1048, %v880, %v1105
    %v1107 = vsel %vm1050, %v950, %v1106
    %v1108 = vsel %vm1038, %v537, %v467
    %v1109 = vsel %vm1040, %v607, %v1108
    %v1110 = vsel %vm1042, %v677, %v1109
    %v1111 = vsel %vm1044, %v747, %v1110
    %v1112 = vsel %vm1046, %v817, %v1111
    %v1113 = vsel %vm1048, %v887, %v1112
    %v1114 = vsel %vm1050, %v957, %v1113
    %v1125 = vadd.f32 %v228, %v1051
    %v1126 = vadd.f32 %v229, %v1058
    %v1127 = vadd.f32 %v230, %v1065
    %v1128 = vadd.f32 %v231, %v1072
    %v1129 = vadd.f32 %v232, %v1079
    %v1130 = vadd.f32 %v233, %v1086
    %v1131 = vadd.f32 %v234, %v1093
    %v1132 = vadd.f32 %v235, %v1100
    %v1133 = vadd.f32 %v236, %v1107
    %v1134 = vadd.f32 %v237, %v1114
    %1135 = vst [vmem:[#allocation2] sm:$0xff] %v1125
    %1136 = vst [vmem:[#allocation2 + $0x8] sm:$0xff] %v1126
    %1137 = vst [vmem:[#allocation2 + $0x10] sm:$0xff] %v1127
    %1138 = vst [vmem:[#allocation2 + $0x18] sm:$0xff] %v1128
    %1139 = vst [vmem:[#allocation2 + $0x20] sm:$0xff] %v1129
    %1140 = vst [vmem:[#allocation2 + $0x28] sm:$0xff] %v1130
    %1141 = vst [vmem:[#allocation2 + $0x30] sm:$0xff] %v1131
    %1142 = vst [vmem:[#allocation2 + $0x38] sm:$0xff] %v1132
    %1143 = vst [vmem:[#allocation2 + $0x40] sm:$0xff] %v1133
    %1144 = vst [vmem:[#allocation2 + $0x48] sm:$0xff] %v1134
    // Predicated region
    $region74: #{tpu_custom_call.1} parent=1 // pred_check
      %p1145 = pneg %p134
    $region75: #{tpu_custom_call.1} parent=1 // pred_check_branch
      %1147 = sbr.rel (%p1145) target = $region77
    $region76: #{tpu_custom_call.1} parent=1 // pred_region
      %v1148 = vld [vmem:[#allocation2] sm:$0xff]
      %v1149 = vld [vmem:[#allocation2 + $0x8] sm:$0xff]
      %v1150 = vld [vmem:[#allocation2 + $0x10] sm:$0xff]
      %v1151 = vld [vmem:[#allocation2 + $0x18] sm:$0xff]
      %v1152 = vld [vmem:[#allocation2 + $0x20] sm:$0xff]
      %v1153 = vld [vmem:[#allocation2 + $0x28] sm:$0xff]
      %v1154 = vld [vmem:[#allocation2 + $0x30] sm:$0xff]
      %v1155 = vld [vmem:[#allocation2 + $0x38] sm:$0xff]
      %v1156 = vld [vmem:[#allocation2 + $0x40] sm:$0xff]
      %v1157 = vld [vmem:[#allocation2 + $0x48] sm:$0xff]
      %v1158 = vmul.f32 %v1148, 0.0625
      %v1159 = vmul.f32 %v1149, 0.0625
      %v1160 = vmul.f32 %v1150, 0.0625
      %v1161 = vmul.f32 %v1151, 0.0625
      %v1162 = vmul.f32 %v1152, 0.0625
      %v1163 = vmul.f32 %v1153, 0.0625
      %v1164 = vmul.f32 %v1154, 0.0625
      %v1165 = vmul.f32 %v1155, 0.0625
      %v1166 = vmul.f32 %v1156, 0.0625
      %v1167 = vmul.f32 %v1157, 0.0625
      %v1168 = vld [vmem:[#allocation7] sm:$0xff]
      %v1169 = vld [vmem:[#allocation7 + $0x8] sm:$0xff]
      %v1170 = vld [vmem:[#allocation7 + $0x10] sm:$0xff]
      %v1171 = vld [vmem:[#allocation7 + $0x18] sm:$0xff]
      %v1172 = vld [vmem:[#allocation7 + $0x20] sm:$0xff]
      %v1173 = vld [vmem:[#allocation7 + $0x28] sm:$0xff]
      %v1174 = vld [vmem:[#allocation7 + $0x30] sm:$0xff]
      %v1175 = vld [vmem:[#allocation7 + $0x38] sm:$0xff]
      %v1176 = vld [vmem:[#allocation7 + $0x40] sm:$0xff]
      %v1177 = vld [vmem:[#allocation7 + $0x48] sm:$0xff]
      %v1178 = vld [vmem:[#allocation7 + $0x50] sm:$0xff]
      %v1179 = vld [vmem:[#allocation7 + $0x58] sm:$0xff]
      %v1180 = vld [vmem:[#allocation7 + $0x60] sm:$0xff]
      %v1181 = vld [vmem:[#allocation7 + $0x68] sm:$0xff]
      %v1182 = vld [vmem:[#allocation7 + $0x70] sm:$0xff]
      %v1183 = vld [vmem:[#allocation7 + $0x78] sm:$0xff]
      %v1184 = vld [vmem:[#allocation7 + $0x80] sm:$0xff]
      %v1185 = vld [vmem:[#allocation7 + $0x88] sm:$0xff]
      %v1186 = vld [vmem:[#allocation7 + $0x90] sm:$0xff]
      %v1187 = vld [vmem:[#allocation7 + $0x98] sm:$0xff]
      %v1188 = vld [vmem:[#allocation7 + $0xa0] sm:$0xff]
      %v1189 = vld [vmem:[#allocation7 + $0xa8] sm:$0xff]
      %v1190 = vld [vmem:[#allocation7 + $0xb0] sm:$0xff]
      %v1191 = vld [vmem:[#allocation7 + $0xb8] sm:$0xff]
      %v1192 = vld [vmem:[#allocation7 + $0xc0] sm:$0xff]
      %v1193 = vld [vmem:[#allocation7 + $0xc8] sm:$0xff]
      %v1194 = vld [vmem:[#allocation7 + $0xd0] sm:$0xff]
      %v1195 = vld [vmem:[#allocation7 + $0xd8] sm:$0xff]
      %v1196 = vld [vmem:[#allocation7 + $0xe0] sm:$0xff]
      %v1197 = vld [vmem:[#allocation7 + $0xe8] sm:$0xff]
      %v1198 = vld [vmem:[#allocation7 + $0xf0] sm:$0xff]
      %v1199 = vld [vmem:[#allocation7 + $0xf8] sm:$0xff]
      %v1200 = vld [vmem:[#allocation7 + $0x100] sm:$0xff]
      %v1201 = vld [vmem:[#allocation7 + $0x108] sm:$0xff]
      %v1202 = vld [vmem:[#allocation7 + $0x110] sm:$0xff]
      %v1203 = vld [vmem:[#allocation7 + $0x118] sm:$0xff]
      %v1204 = vld [vmem:[#allocation7 + $0x120] sm:$0xff]
      %v1205 = vld [vmem:[#allocation7 + $0x128] sm:$0xff]
      %v1206 = vld [vmem:[#allocation7 + $0x130] sm:$0xff]
      %v1207 = vld [vmem:[#allocation7 + $0x138] sm:$0xff]
      %v1208 = vld [vmem:[#allocation7 + $0x140] sm:$0xff]
      %v1209 = vld [vmem:[#allocation7 + $0x148] sm:$0xff]
      %v1210 = vld [vmem:[#allocation7 + $0x150] sm:$0xff]
      %v1211 = vld [vmem:[#allocation7 + $0x158] sm:$0xff]
      %v1212 = vld [vmem:[#allocation7 + $0x160] sm:$0xff]
      %v1213 = vld [vmem:[#allocation7 + $0x168] sm:$0xff]
      %v1214 = vld [vmem:[#allocation7 + $0x170] sm:$0xff]
      %v1215 = vld [vmem:[#allocation7 + $0x178] sm:$0xff]
      %v1216 = vld [vmem:[#allocation7 + $0x180] sm:$0xff]
      %v1217 = vld [vmem:[#allocation7 + $0x188] sm:$0xff]
      %v1218 = vld [vmem:[#allocation7 + $0x190] sm:$0xff]
      %v1219 = vld [vmem:[#allocation7 + $0x198] sm:$0xff]
      %v1220 = vld [vmem:[#allocation7 + $0x1a0] sm:$0xff]
      %v1221 = vld [vmem:[#allocation7 + $0x1a8] sm:$0xff]
      %v1222 = vld [vmem:[#allocation7 + $0x1b0] sm:$0xff]
      %v1223 = vld [vmem:[#allocation7 + $0x1b8] sm:$0xff]
      %v1224 = vld [vmem:[#allocation7 + $0x1c0] sm:$0xff]
      %v1225 = vld [vmem:[#allocation7 + $0x1c8] sm:$0xff]
      %v1226 = vld [vmem:[#allocation7 + $0x1d0] sm:$0xff]
      %v1227 = vld [vmem:[#allocation7 + $0x1d8] sm:$0xff]
      %v1228 = vld [vmem:[#allocation7 + $0x1e0] sm:$0xff]
      %v1229 = vld [vmem:[#allocation7 + $0x1e8] sm:$0xff]
      %v1230 = vld [vmem:[#allocation7 + $0x1f0] sm:$0xff]
      %v1231 = vld [vmem:[#allocation7 + $0x1f8] sm:$0xff]
      %v1232 = vld [vmem:[#allocation7 + $0x200] sm:$0xff]
      %v1233 = vld [vmem:[#allocation7 + $0x208] sm:$0xff]
      %v1234 = vld [vmem:[#allocation7 + $0x210] sm:$0xff]
      %v1235 = vld [vmem:[#allocation7 + $0x218] sm:$0xff]
      %v1236 = vld [vmem:[#allocation7 + $0x220] sm:$0xff]
      %v1237 = vld [vmem:[#allocation7 + $0x228] sm:$0xff]
      %v1238 = vld [vmem:[#allocation7 + $0x230] sm:$0xff]
      %v1239 = vld [vmem:[#allocation7 + $0x238] sm:$0xff]
      %v1240 = vld [vmem:[#allocation7 + $0x240] sm:$0xff]
      %v1241 = vld [vmem:[#allocation7 + $0x248] sm:$0xff]
      %v1242 = vld [vmem:[#allocation7 + $0x250] sm:$0xff]
      %v1243 = vld [vmem:[#allocation7 + $0x258] sm:$0xff]
      %v1244 = vld [vmem:[#allocation7 + $0x260] sm:$0xff]
      %v1245 = vld [vmem:[#allocation7 + $0x268] sm:$0xff]
      %v1246 = vld [vmem:[#allocation7 + $0x270] sm:$0xff]
      %v1247 = vld [vmem:[#allocation7 + $0x278] sm:$0xff]
      %v1248 = vld [vmem:[#allocation7 + $0x280] sm:$0xff]
      %v1249 = vld [vmem:[#allocation7 + $0x288] sm:$0xff]
      %v1250 = vld [vmem:[#allocation7 + $0x290] sm:$0xff]
      %v1251 = vld [vmem:[#allocation7 + $0x298] sm:$0xff]
      %v1252 = vld [vmem:[#allocation7 + $0x2a0] sm:$0xff]
      %v1253 = vld [vmem:[#allocation7 + $0x2a8] sm:$0xff]
      %v1254 = vld [vmem:[#allocation7 + $0x2b0] sm:$0xff]
      %v1255 = vld [vmem:[#allocation7 + $0x2b8] sm:$0xff]
      %v1256 = vld [vmem:[#allocation7 + $0x2c0] sm:$0xff]
      %v1257 = vld [vmem:[#allocation7 + $0x2c8] sm:$0xff]
      %v1258 = vld [vmem:[#allocation7 + $0x2d0] sm:$0xff]
      %v1259 = vld [vmem:[#allocation7 + $0x2d8] sm:$0xff]
      %v1260 = vld [vmem:[#allocation7 + $0x2e0] sm:$0xff]
      %v1261 = vld [vmem:[#allocation7 + $0x2e8] sm:$0xff]
      %v1262 = vld [vmem:[#allocation7 + $0x2f0] sm:$0xff]
      %v1263 = vld [vmem:[#allocation7 + $0x2f8] sm:$0xff]
      %v1264 = vld [vmem:[#allocation7 + $0x300] sm:$0xff]
      %v1265 = vld [vmem:[#allocation7 + $0x308] sm:$0xff]
      %v1266 = vld [vmem:[#allocation7 + $0x310] sm:$0xff]
      %v1267 = vld [vmem:[#allocation7 + $0x318] sm:$0xff]
      %v1268 = vld [vmem:[#allocation7 + $0x320] sm:$0xff]
      %v1269 = vld [vmem:[#allocation7 + $0x328] sm:$0xff]
      %v1270 = vld [vmem:[#allocation7 + $0x330] sm:$0xff]
      %v1271 = vld [vmem:[#allocation7 + $0x338] sm:$0xff]
      %v1272 = vld [vmem:[#allocation7 + $0x340] sm:$0xff]
      %v1273 = vld [vmem:[#allocation7 + $0x348] sm:$0xff]
      %v1274 = vld [vmem:[#allocation7 + $0x350] sm:$0xff]
      %v1275 = vld [vmem:[#allocation7 + $0x358] sm:$0xff]
      %v1276 = vld [vmem:[#allocation7 + $0x360] sm:$0xff]
      %v1277 = vld [vmem:[#allocation7 + $0x368] sm:$0xff]
      %v1278 = vld [vmem:[#allocation7 + $0x370] sm:$0xff]
      %v1279 = vld [vmem:[#allocation7 + $0x378] sm:$0xff]
      %v1280 = vld [vmem:[#allocation7 + $0x380] sm:$0xff]
      %v1281 = vld [vmem:[#allocation7 + $0x388] sm:$0xff]
      %v1282 = vld [vmem:[#allocation7 + $0x390] sm:$0xff]
      %v1283 = vld [vmem:[#allocation7 + $0x398] sm:$0xff]
      %v1284 = vld [vmem:[#allocation7 + $0x3a0] sm:$0xff]
      %v1285 = vld [vmem:[#allocation7 + $0x3a8] sm:$0xff]
      %v1286 = vld [vmem:[#allocation7 + $0x3b0] sm:$0xff]
      %v1287 = vld [vmem:[#allocation7 + $0x3b8] sm:$0xff]
      %v1288 = vld [vmem:[#allocation7 + $0x3c0] sm:$0xff]
      %v1289 = vld [vmem:[#allocation7 + $0x3c8] sm:$0xff]
      %v1290 = vld [vmem:[#allocation7 + $0x3d0] sm:$0xff]
      %v1291 = vld [vmem:[#allocation7 + $0x3d8] sm:$0xff]
      %v1292 = vld [vmem:[#allocation7 + $0x3e0] sm:$0xff]
      %v1293 = vld [vmem:[#allocation7 + $0x3e8] sm:$0xff]
      %v1294 = vld [vmem:[#allocation7 + $0x3f0] sm:$0xff]
      %v1295 = vld [vmem:[#allocation7 + $0x3f8] sm:$0xff]
      %v1296 = vld [vmem:[#allocation7 + $0x400] sm:$0xff]
      %v1297 = vld [vmem:[#allocation7 + $0x408] sm:$0xff]
      %v1298 = vld [vmem:[#allocation7 + $0x410] sm:$0xff]
      %v1299 = vld [vmem:[#allocation7 + $0x418] sm:$0xff]
      %v1300 = vld [vmem:[#allocation7 + $0x420] sm:$0xff]
      %v1301 = vld [vmem:[#allocation7 + $0x428] sm:$0xff]
      %v1302 = vld [vmem:[#allocation7 + $0x430] sm:$0xff]
      %v1303 = vld [vmem:[#allocation7 + $0x438] sm:$0xff]
      %v1304 = vld [vmem:[#allocation7 + $0x440] sm:$0xff]
      %v1305 = vld [vmem:[#allocation7 + $0x448] sm:$0xff]
      %v1306 = vld [vmem:[#allocation7 + $0x450] sm:$0xff]
      %v1307 = vld [vmem:[#allocation7 + $0x458] sm:$0xff]
      %v1308 = vld [vmem:[#allocation7 + $0x460] sm:$0xff]
      %v1309 = vld [vmem:[#allocation7 + $0x468] sm:$0xff]
      %v1310 = vld [vmem:[#allocation7 + $0x470] sm:$0xff]
      %v1311 = vld [vmem:[#allocation7 + $0x478] sm:$0xff]
      %v1312 = vld [vmem:[#allocation7 + $0x480] sm:$0xff]
      %v1313 = vld [vmem:[#allocation7 + $0x488] sm:$0xff]
      %v1314 = vld [vmem:[#allocation7 + $0x490] sm:$0xff]
      %v1315 = vld [vmem:[#allocation7 + $0x498] sm:$0xff]
      %v1316 = vld [vmem:[#allocation7 + $0x4a0] sm:$0xff]
      %v1317 = vld [vmem:[#allocation7 + $0x4a8] sm:$0xff]
      %v1318 = vld [vmem:[#allocation7 + $0x4b0] sm:$0xff]
      %v1319 = vld [vmem:[#allocation7 + $0x4b8] sm:$0xff]
      %v1320 = vld [vmem:[#allocation7 + $0x4c0] sm:$0xff]
      %v1321 = vld [vmem:[#allocation7 + $0x4c8] sm:$0xff]
      %v1322 = vld [vmem:[#allocation7 + $0x4d0] sm:$0xff]
      %v1323 = vld [vmem:[#allocation7 + $0x4d8] sm:$0xff]
      %v1324 = vld [vmem:[#allocation7 + $0x4e0] sm:$0xff]
      %v1325 = vld [vmem:[#allocation7 + $0x4e8] sm:$0xff]
      %v1326 = vld [vmem:[#allocation7 + $0x4f0] sm:$0xff]
      %v1327 = vld [vmem:[#allocation7 + $0x4f8] sm:$0xff]
      %v1328 = vld [vmem:[#allocation7 + $0x500] sm:$0xff]
      %v1329 = vld [vmem:[#allocation7 + $0x508] sm:$0xff]
      %v1330 = vld [vmem:[#allocation7 + $0x510] sm:$0xff]
      %v1331 = vld [vmem:[#allocation7 + $0x518] sm:$0xff]
      %v1332 = vld [vmem:[#allocation7 + $0x520] sm:$0xff]
      %v1333 = vld [vmem:[#allocation7 + $0x528] sm:$0xff]
      %v1334 = vld [vmem:[#allocation7 + $0x530] sm:$0xff]
      %v1335 = vld [vmem:[#allocation7 + $0x538] sm:$0xff]
      %v1336 = vld [vmem:[#allocation7 + $0x540] sm:$0xff]
      %v1337 = vld [vmem:[#allocation7 + $0x548] sm:$0xff]
      %v1338 = vld [vmem:[#allocation7 + $0x550] sm:$0xff]
      %v1339 = vld [vmem:[#allocation7 + $0x558] sm:$0xff]
      %v1340 = vld [vmem:[#allocation7 + $0x560] sm:$0xff]
      %v1341 = vld [vmem:[#allocation7 + $0x568] sm:$0xff]
      %v1342 = vld [vmem:[#allocation7 + $0x570] sm:$0xff]
      %v1343 = vld [vmem:[#allocation7 + $0x578] sm:$0xff]
      %v1344 = vld [vmem:[#allocation7 + $0x580] sm:$0xff]
      %v1345 = vld [vmem:[#allocation7 + $0x588] sm:$0xff]
      %v1346 = vld [vmem:[#allocation7 + $0x590] sm:$0xff]
      %v1347 = vld [vmem:[#allocation7 + $0x598] sm:$0xff]
      %v1348 = vld [vmem:[#allocation7 + $0x5a0] sm:$0xff]
      %v1349 = vld [vmem:[#allocation7 + $0x5a8] sm:$0xff]
      %v1350 = vld [vmem:[#allocation7 + $0x5b0] sm:$0xff]
      %v1351 = vld [vmem:[#allocation7 + $0x5b8] sm:$0xff]
      %v1352 = vld [vmem:[#allocation7 + $0x5c0] sm:$0xff]
      %v1353 = vld [vmem:[#allocation7 + $0x5c8] sm:$0xff]
      %v1354 = vld [vmem:[#allocation7 + $0x5d0] sm:$0xff]
      %v1355 = vld [vmem:[#allocation7 + $0x5d8] sm:$0xff]
      %v1356 = vld [vmem:[#allocation7 + $0x5e0] sm:$0xff]
      %v1357 = vld [vmem:[#allocation7 + $0x5e8] sm:$0xff]
      %v1358 = vld [vmem:[#allocation7 + $0x5f0] sm:$0xff]
      %v1359 = vld [vmem:[#allocation7 + $0x5f8] sm:$0xff]
      %v1360 = vld [vmem:[#allocation7 + $0x600] sm:$0xff]
      %v1361 = vld [vmem:[#allocation7 + $0x608] sm:$0xff]
      %v1362 = vld [vmem:[#allocation7 + $0x610] sm:$0xff]
      %v1363 = vld [vmem:[#allocation7 + $0x618] sm:$0xff]
      %v1364 = vld [vmem:[#allocation7 + $0x620] sm:$0xff]
      %v1365 = vld [vmem:[#allocation7 + $0x628] sm:$0xff]
      %v1366 = vld [vmem:[#allocation7 + $0x630] sm:$0xff]
      %v1367 = vld [vmem:[#allocation7 + $0x638] sm:$0xff]
      %v1368 = vld [vmem:[#allocation7 + $0x640] sm:$0xff]
      %v1369 = vld [vmem:[#allocation7 + $0x648] sm:$0xff]
      %v1370 = vld [vmem:[#allocation7 + $0x650] sm:$0xff]
      %v1371 = vld [vmem:[#allocation7 + $0x658] sm:$0xff]
      %v1372 = vld [vmem:[#allocation7 + $0x660] sm:$0xff]
      %v1373 = vld [vmem:[#allocation7 + $0x668] sm:$0xff]
      %v1374 = vld [vmem:[#allocation7 + $0x670] sm:$0xff]
      %v1375 = vld [vmem:[#allocation7 + $0x678] sm:$0xff]
      %v1376 = vld [vmem:[#allocation7 + $0x680] sm:$0xff]
      %v1377 = vld [vmem:[#allocation7 + $0x688] sm:$0xff]
      %v1378 = vld [vmem:[#allocation7 + $0x690] sm:$0xff]
      %v1379 = vld [vmem:[#allocation7 + $0x698] sm:$0xff]
      %v1380 = vld [vmem:[#allocation7 + $0x6a0] sm:$0xff]
      %v1381 = vld [vmem:[#allocation7 + $0x6a8] sm:$0xff]
      %v1382 = vld [vmem:[#allocation7 + $0x6b0] sm:$0xff]
      %v1383 = vld [vmem:[#allocation7 + $0x6b8] sm:$0xff]
      %v1384 = vld [vmem:[#allocation7 + $0x6c0] sm:$0xff]
      %v1385 = vld [vmem:[#allocation7 + $0x6c8] sm:$0xff]
      %v1386 = vld [vmem:[#allocation7 + $0x6d0] sm:$0xff]
      %v1387 = vld [vmem:[#allocation7 + $0x6d8] sm:$0xff]
      %v1388 = vld [vmem:[#allocation7 + $0x6e0] sm:$0xff]
      %v1389 = vld [vmem:[#allocation7 + $0x6e8] sm:$0xff]
      %v1390 = vld [vmem:[#allocation7 + $0x6f0] sm:$0xff]
      %v1391 = vld [vmem:[#allocation7 + $0x6f8] sm:$0xff]
      %v1392 = vld [vmem:[#allocation7 + $0x700] sm:$0xff]
      %v1393 = vld [vmem:[#allocation7 + $0x708] sm:$0xff]
      %v1394 = vld [vmem:[#allocation7 + $0x710] sm:$0xff]
      %v1395 = vld [vmem:[#allocation7 + $0x718] sm:$0xff]
      %v1396 = vld [vmem:[#allocation7 + $0x720] sm:$0xff]
      %v1397 = vld [vmem:[#allocation7 + $0x728] sm:$0xff]
      %v1398 = vld [vmem:[#allocation7 + $0x730] sm:$0xff]
      %v1399 = vld [vmem:[#allocation7 + $0x738] sm:$0xff]
      %v1400 = vld [vmem:[#allocation7 + $0x740] sm:$0xff]
      %v1401 = vld [vmem:[#allocation7 + $0x748] sm:$0xff]
      %v1402 = vld [vmem:[#allocation7 + $0x750] sm:$0xff]
      %v1403 = vld [vmem:[#allocation7 + $0x758] sm:$0xff]
      %v1404 = vld [vmem:[#allocation7 + $0x760] sm:$0xff]
      %v1405 = vld [vmem:[#allocation7 + $0x768] sm:$0xff]
      %v1406 = vld [vmem:[#allocation7 + $0x770] sm:$0xff]
      %v1407 = vld [vmem:[#allocation7 + $0x778] sm:$0xff]
      %v1408 = vld [vmem:[#allocation7 + $0x780] sm:$0xff]
      %v1409 = vld [vmem:[#allocation7 + $0x788] sm:$0xff]
      %v1410 = vld [vmem:[#allocation7 + $0x790] sm:$0xff]
      %v1411 = vld [vmem:[#allocation7 + $0x798] sm:$0xff]
      %v1412 = vld [vmem:[#allocation7 + $0x7a0] sm:$0xff]
      %v1413 = vld [vmem:[#allocation7 + $0x7a8] sm:$0xff]
      %v1414 = vld [vmem:[#allocation7 + $0x7b0] sm:$0xff]
      %v1415 = vld [vmem:[#allocation7 + $0x7b8] sm:$0xff]
      %v1416 = vld [vmem:[#allocation7 + $0x7c0] sm:$0xff]
      %v1417 = vld [vmem:[#allocation7 + $0x7c8] sm:$0xff]
      %v1418 = vld [vmem:[#allocation7 + $0x7d0] sm:$0xff]
      %v1419 = vld [vmem:[#allocation7 + $0x7d8] sm:$0xff]
      %v1420 = vld [vmem:[#allocation7 + $0x7e0] sm:$0xff]
      %v1421 = vld [vmem:[#allocation7 + $0x7e8] sm:$0xff]
      %v1422 = vld [vmem:[#allocation7 + $0x7f0] sm:$0xff]
      %v1423 = vld [vmem:[#allocation7 + $0x7f8] sm:$0xff]
      %v1424 = vld [vmem:[#allocation7 + $0x800] sm:$0xff]
      %v1425 = vld [vmem:[#allocation7 + $0x808] sm:$0xff]
      %v1426 = vld [vmem:[#allocation7 + $0x810] sm:$0xff]
      %v1427 = vld [vmem:[#allocation7 + $0x818] sm:$0xff]
      %v1428 = vld [vmem:[#allocation7 + $0x820] sm:$0xff]
      %v1429 = vld [vmem:[#allocation7 + $0x828] sm:$0xff]
      %v1430 = vld [vmem:[#allocation7 + $0x830] sm:$0xff]
      %v1431 = vld [vmem:[#allocation7 + $0x838] sm:$0xff]
      %v1432 = vld [vmem:[#allocation7 + $0x840] sm:$0xff]
      %v1433 = vld [vmem:[#allocation7 + $0x848] sm:$0xff]
      %v1434 = vld [vmem:[#allocation7 + $0x850] sm:$0xff]
      %v1435 = vld [vmem:[#allocation7 + $0x858] sm:$0xff]
      %v1436 = vld [vmem:[#allocation7 + $0x860] sm:$0xff]
      %v1437 = vld [vmem:[#allocation7 + $0x868] sm:$0xff]
      %v1438 = vld [vmem:[#allocation7 + $0x870] sm:$0xff]
      %v1439 = vld [vmem:[#allocation7 + $0x878] sm:$0xff]
      %v1440 = vld [vmem:[#allocation7 + $0x880] sm:$0xff]
      %v1441 = vld [vmem:[#allocation7 + $0x888] sm:$0xff]
      %v1442 = vld [vmem:[#allocation7 + $0x890] sm:$0xff]
      %v1443 = vld [vmem:[#allocation7 + $0x898] sm:$0xff]
      %v1444 = vld [vmem:[#allocation7 + $0x8a0] sm:$0xff]
      %v1445 = vld [vmem:[#allocation7 + $0x8a8] sm:$0xff]
      %v1446 = vld [vmem:[#allocation7 + $0x8b0] sm:$0xff]
      %v1447 = vld [vmem:[#allocation7 + $0x8b8] sm:$0xff]
      %v1448 = vld [vmem:[#allocation7 + $0x8c0] sm:$0xff]
      %v1449 = vld [vmem:[#allocation7 + $0x8c8] sm:$0xff]
      %v1450 = vld [vmem:[#allocation7 + $0x8d0] sm:$0xff]
      %v1451 = vld [vmem:[#allocation7 + $0x8d8] sm:$0xff]
      %v1452 = vld [vmem:[#allocation7 + $0x8e0] sm:$0xff]
      %v1453 = vld [vmem:[#allocation7 + $0x8e8] sm:$0xff]
      %v1454 = vld [vmem:[#allocation7 + $0x8f0] sm:$0xff]
      %v1455 = vld [vmem:[#allocation7 + $0x8f8] sm:$0xff]
      %v1456 = vld [vmem:[#allocation7 + $0x900] sm:$0xff]
      %v1457 = vld [vmem:[#allocation7 + $0x908] sm:$0xff]
      %v1458 = vld [vmem:[#allocation7 + $0x910] sm:$0xff]
      %v1459 = vld [vmem:[#allocation7 + $0x918] sm:$0xff]
      %v1460 = vld [vmem:[#allocation7 + $0x920] sm:$0xff]
      %v1461 = vld [vmem:[#allocation7 + $0x928] sm:$0xff]
      %v1462 = vld [vmem:[#allocation7 + $0x930] sm:$0xff]
      %v1463 = vld [vmem:[#allocation7 + $0x938] sm:$0xff]
      %v1464 = vld [vmem:[#allocation7 + $0x940] sm:$0xff]
      %v1465 = vld [vmem:[#allocation7 + $0x948] sm:$0xff]
      %v1466 = vld [vmem:[#allocation7 + $0x950] sm:$0xff]
      %v1467 = vld [vmem:[#allocation7 + $0x958] sm:$0xff]
      %v1468 = vld [vmem:[#allocation7 + $0x960] sm:$0xff]
      %v1469 = vld [vmem:[#allocation7 + $0x968] sm:$0xff]
      %v1470 = vld [vmem:[#allocation7 + $0x970] sm:$0xff]
      %v1471 = vld [vmem:[#allocation7 + $0x978] sm:$0xff]
      %v1472 = vld [vmem:[#allocation7 + $0x980] sm:$0xff]
      %v1473 = vld [vmem:[#allocation7 + $0x988] sm:$0xff]
      %v1474 = vld [vmem:[#allocation7 + $0x990] sm:$0xff]
      %v1475 = vld [vmem:[#allocation7 + $0x998] sm:$0xff]
      %v1476 = vld [vmem:[#allocation7 + $0x9a0] sm:$0xff]
      %v1477 = vld [vmem:[#allocation7 + $0x9a8] sm:$0xff]
      %v1478 = vld [vmem:[#allocation7 + $0x9b0] sm:$0xff]
      %v1479 = vld [vmem:[#allocation7 + $0x9b8] sm:$0xff]
      %v1480 = vld [vmem:[#allocation7 + $0x9c0] sm:$0xff]
      %v1481 = vld [vmem:[#allocation7 + $0x9c8] sm:$0xff]
      %v1482 = vld [vmem:[#allocation7 + $0x9d0] sm:$0xff]
      %v1483 = vld [vmem:[#allocation7 + $0x9d8] sm:$0xff]
      %v1484 = vld [vmem:[#allocation7 + $0x9e0] sm:$0xff]
      %v1485 = vld [vmem:[#allocation7 + $0x9e8] sm:$0xff]
      %v1486 = vld [vmem:[#allocation7 + $0x9f0] sm:$0xff]
      %v1487 = vld [vmem:[#allocation7 + $0x9f8] sm:$0xff]
      %v1488 = vld [vmem:[#allocation9] sm:$0x3]
      %v1490 = vlaneseq
      %v1491 = vshrl.u32 %v1490, 7
      %v1492 = vsub.s32 0, %v1491
      %v1493 = vrot.slane %v1488, %v1492
      %v1494 = vlaneseq
      %v1495 = vshrl.u32 %v1494, 7
      %v1496 = vsub.s32 1, %v1495
      %v1497 = vrot.slane %v1488, %v1496
      %1500 = vmatprep.subr.mxu0 %v1169
      %1501 = vmatpush1.msra.mxu0 %v1168
      %1502 = vmatprep.subr.mxu0 %v1171
      %1503 = vmatpush1.msra.mxu0 %v1170
      %1504 = vmatprep.subr.mxu0 %v1173
      %1505 = vmatpush1.msra.mxu0 %v1172
      %1506 = vmatprep.subr.mxu0 %v1175
      %1507 = vmatpush1.msra.mxu0 %v1174
      %1508 = vmatprep.subr.mxu0 %v1177
      %1509 = vmatpush1.msra.mxu0 %v1176
      %1510 = vmatprep.subr.mxu0 %v1179
      %1511 = vmatpush1.msra.mxu0 %v1178
      %1512 = vmatprep.subr.mxu0 %v1181
      %1513 = vmatpush1.msra.mxu0 %v1180
      %1514 = vmatprep.subr.mxu0 %v1183
      %1515 = vmatpush1.msra.mxu0 %v1182
      %1516 = vmatprep.subr.mxu0 %v1185
      %1517 = vmatpush1.msra.mxu0 %v1184
      %1518 = vmatprep.subr.mxu0 %v1187
      %1519 = vmatpush1.msra.mxu0 %v1186
      %1520 = vmatprep.subr.mxu0 %v1189
      %1521 = vmatpush1.msra.mxu0 %v1188
      %1522 = vmatprep.subr.mxu0 %v1191
      %1523 = vmatpush1.msra.mxu0 %v1190
      %1524 = vmatprep.subr.mxu0 %v1193
      %1525 = vmatpush1.msra.mxu0 %v1192
      %1526 = vmatprep.subr.mxu0 %v1195
      %1527 = vmatpush1.msra.mxu0 %v1194
      %1528 = vmatprep.subr.mxu0 %v1197
      %1529 = vmatpush1.msra.mxu0 %v1196
      %1530 = vmatprep.subr.mxu0 %v1199
      %1531 = vmatpush1.msra.mxu0 %v1198
      %1532 = vmatprep.subr.mxu0 %v1201
      %1533 = vmatpush1.msra.mxu0 %v1200
      %1534 = vmatprep.subr.mxu0 %v1203
      %1535 = vmatpush1.msra.mxu0 %v1202
      %1536 = vmatprep.subr.mxu0 %v1205
      %1537 = vmatpush1.msra.mxu0 %v1204
      %1538 = vmatprep.subr.mxu0 %v1207
      %1539 = vmatpush1.msra.mxu0 %v1206
      %1540 = vmatprep.subr.mxu0 %v1209
      %1541 = vmatpush1.msra.mxu0 %v1208
      %1542 = vmatprep.subr.mxu0 %v1211
      %1543 = vmatpush1.msra.mxu0 %v1210
      %1544 = vmatprep.subr.mxu0 %v1213
      %1545 = vmatpush1.msra.mxu0 %v1212
      %1546 = vmatprep.subr.mxu0 %v1215
      %1547 = vmatpush1.msra.mxu0 %v1214
      %1548 = vmatprep.subr.mxu0 %v1217
      %1549 = vmatpush1.msra.mxu0 %v1216
      %1550 = vmatprep.subr.mxu0 %v1219
      %1551 = vmatpush1.msra.mxu0 %v1218
      %1552 = vmatprep.subr.mxu0 %v1221
      %1553 = vmatpush1.msra.mxu0 %v1220
      %1554 = vmatprep.subr.mxu0 %v1223
      %1555 = vmatpush1.msra.mxu0 %v1222
      %1556 = vmatprep.subr.mxu0 %v1225
      %1557 = vmatpush1.msra.mxu0 %v1224
      %1558 = vmatprep.subr.mxu0 %v1227
      %1559 = vmatpush1.msra.mxu0 %v1226
      %1560 = vmatprep.subr.mxu0 %v1229
      %1561 = vmatpush1.msra.mxu0 %v1228
      %1562 = vmatprep.subr.mxu0 %v1231
      %1563 = vmatpush1.msra.mxu0 %v1230
      %1564 = vmatprep.mubr.f32.mxu0 %v1159
      %1565 = vmatmul.mubr.f32.gmra.mrb[0].mxu0 %v1158
      %v1566 = vpop.f32.mrb[0].mxu0
      %v1567 = vadd.f32 %v1493, %v1566
      %v1568 = vpop.f32.mrb[0].mxu0
      %v1569 = vadd.f32 %v1497, %v1568
      %1570 = vdwg.mxu0
      %1571 = vmatprep.subr.mxu0 %v1233
      %1572 = vmatpush1.msra.mxu0 %v1232
      %1573 = vmatprep.subr.mxu0 %v1235
      %1574 = vmatpush1.msra.mxu0 %v1234
      %1575 = vmatprep.subr.mxu0 %v1237
      %1576 = vmatpush1.msra.mxu0 %v1236
      %1577 = vmatprep.subr.mxu0 %v1239
      %1578 = vmatpush1.msra.mxu0 %v1238
      %1579 = vmatprep.subr.mxu0 %v1241
      %1580 = vmatpush1.msra.mxu0 %v1240
      %1581 = vmatprep.subr.mxu0 %v1243
      %1582 = vmatpush1.msra.mxu0 %v1242
      %1583 = vmatprep.subr.mxu0 %v1245
      %1584 = vmatpush1.msra.mxu0 %v1244
      %1585 = vmatprep.subr.mxu0 %v1247
      %1586 = vmatpush1.msra.mxu0 %v1246
      %1587 = vmatprep.subr.mxu0 %v1249
      %1588 = vmatpush1.msra.mxu0 %v1248
      %1589 = vmatprep.subr.mxu0 %v1251
      %1590 = vmatpush1.msra.mxu0 %v1250
      %1591 = vmatprep.subr.mxu0 %v1253
      %1592 = vmatpush1.msra.mxu0 %v1252
      %1593 = vmatprep.subr.mxu0 %v1255
      %1594 = vmatpush1.msra.mxu0 %v1254
      %1595 = vmatprep.subr.mxu0 %v1257
      %1596 = vmatpush1.msra.mxu0 %v1256
      %1597 = vmatprep.subr.mxu0 %v1259
      %1598 = vmatpush1.msra.mxu0 %v1258
      %1599 = vmatprep.subr.mxu0 %v1261
      %1600 = vmatpush1.msra.mxu0 %v1260
      %1601 = vmatprep.subr.mxu0 %v1263
      %1602 = vmatpush1.msra.mxu0 %v1262
      %1603 = vmatprep.subr.mxu0 %v1265
      %1604 = vmatpush1.msra.mxu0 %v1264
      %1605 = vmatprep.subr.mxu0 %v1267
      %1606 = vmatpush1.msra.mxu0 %v1266
      %1607 = vmatprep.subr.mxu0 %v1269
      %1608 = vmatpush1.msra.mxu0 %v1268
      %1609 = vmatprep.subr.mxu0 %v1271
      %1610 = vmatpush1.msra.mxu0 %v1270
      %1611 = vmatprep.subr.mxu0 %v1273
      %1612 = vmatpush1.msra.mxu0 %v1272
      %1613 = vmatprep.subr.mxu0 %v1275
      %1614 = vmatpush1.msra.mxu0 %v1274
      %1615 = vmatprep.subr.mxu0 %v1277
      %1616 = vmatpush1.msra.mxu0 %v1276
      %1617 = vmatprep.subr.mxu0 %v1279
      %1618 = vmatpush1.msra.mxu0 %v1278
      %1619 = vmatprep.subr.mxu0 %v1281
      %1620 = vmatpush1.msra.mxu0 %v1280
      %1621 = vmatprep.subr.mxu0 %v1283
      %1622 = vmatpush1.msra.mxu0 %v1282
      %1623 = vmatprep.subr.mxu0 %v1285
      %1624 = vmatpush1.msra.mxu0 %v1284
      %1625 = vmatprep.subr.mxu0 %v1287
      %1626 = vmatpush1.msra.mxu0 %v1286
      %1627 = vmatprep.subr.mxu0 %v1289
      %1628 = vmatpush1.msra.mxu0 %v1288
      %1629 = vmatprep.subr.mxu0 %v1291
      %1630 = vmatpush1.msra.mxu0 %v1290
      %1631 = vmatprep.subr.mxu0 %v1293
      %1632 = vmatpush1.msra.mxu0 %v1292
      %1633 = vmatprep.subr.mxu0 %v1295
      %1634 = vmatpush1.msra.mxu0 %v1294
      %1635 = vmatprep.mubr.f32.mxu0 %v1161
      %1636 = vmatmul.mubr.f32.gmra.mrb[0].mxu0 %v1160
      %v1637 = vpop.f32.mrb[0].mxu0
      %v1638 = vadd.f32 %v1567, %v1637
      %v1639 = vpop.f32.mrb[0].mxu0
      %v1640 = vadd.f32 %v1569, %v1639
      %1641 = vdwg.mxu0
      %1642 = vmatprep.subr.mxu0 %v1297
      %1643 = vmatpush1.msra.mxu0 %v1296
      %1644 = vmatprep.subr.mxu0 %v1299
      %1645 = vmatpush1.msra.mxu0 %v1298
      %1646 = vmatprep.subr.mxu0 %v1301
      %1647 = vmatpush1.msra.mxu0 %v1300
      %1648 = vmatprep.subr.mxu0 %v1303
      %1649 = vmatpush1.msra.mxu0 %v1302
      %1650 = vmatprep.subr.mxu0 %v1305
      %1651 = vmatpush1.msra.mxu0 %v1304
      %1652 = vmatprep.subr.mxu0 %v1307
      %1653 = vmatpush1.msra.mxu0 %v1306
      %1654 = vmatprep.subr.mxu0 %v1309
      %1655 = vmatpush1.msra.mxu0 %v1308
      %1656 = vmatprep.subr.mxu0 %v1311
      %1657 = vmatpush1.msra.mxu0 %v1310
      %1658 = vmatprep.subr.mxu0 %v1313
      %1659 = vmatpush1.msra.mxu0 %v1312
      %1660 = vmatprep.subr.mxu0 %v1315
      %1661 = vmatpush1.msra.mxu0 %v1314
      %1662 = vmatprep.subr.mxu0 %v1317
      %1663 = vmatpush1.msra.mxu0 %v1316
      %1664 = vmatprep.subr.mxu0 %v1319
      %1665 = vmatpush1.msra.mxu0 %v1318
      %1666 = vmatprep.subr.mxu0 %v1321
      %1667 = vmatpush1.msra.mxu0 %v1320
      %1668 = vmatprep.subr.mxu0 %v1323
      %1669 = vmatpush1.msra.mxu0 %v1322
      %1670 = vmatprep.subr.mxu0 %v1325
      %1671 = vmatpush1.msra.mxu0 %v1324
      %1672 = vmatprep.subr.mxu0 %v1327
      %1673 = vmatpush1.msra.mxu0 %v1326
      %1674 = vmatprep.subr.mxu0 %v1329
      %1675 = vmatpush1.msra.mxu0 %v1328
      %1676 = vmatprep.subr.mxu0 %v1331
      %1677 = vmatpush1.msra.mxu0 %v1330
      %1678 = vmatprep.subr.mxu0 %v1333
      %1679 = vmatpush1.msra.mxu0 %v1332
      %1680 = vmatprep.subr.mxu0 %v1335
      %1681 = vmatpush1.msra.mxu0 %v1334
      %1682 = vmatprep.subr.mxu0 %v1337
      %1683 = vmatpush1.msra.mxu0 %v1336
      %1684 = vmatprep.subr.mxu0 %v1339
      %1685 = vmatpush1.msra.mxu0 %v1338
      %1686 = vmatprep.subr.mxu0 %v1341
      %1687 = vmatpush1.msra.mxu0 %v1340
      %1688 = vmatprep.subr.mxu0 %v1343
      %1689 = vmatpush1.msra.mxu0 %v1342
      %1690 = vmatprep.subr.mxu0 %v1345
      %1691 = vmatpush1.msra.mxu0 %v1344
      %1692 = vmatprep.subr.mxu0 %v1347
      %1693 = vmatpush1.msra.mxu0 %v1346
      %1694 = vmatprep.subr.mxu0 %v1349
      %1695 = vmatpush1.msra.mxu0 %v1348
      %1696 = vmatprep.subr.mxu0 %v1351
      %1697 = vmatpush1.msra.mxu0 %v1350
      %1698 = vmatprep.subr.mxu0 %v1353
      %1699 = vmatpush1.msra.mxu0 %v1352
      %1700 = vmatprep.subr.mxu0 %v1355
      %1701 = vmatpush1.msra.mxu0 %v1354
      %1702 = vmatprep.subr.mxu0 %v1357
      %1703 = vmatpush1.msra.mxu0 %v1356
      %1704 = vmatprep.subr.mxu0 %v1359
      %1705 = vmatpush1.msra.mxu0 %v1358
      %1706 = vmatprep.mubr.f32.mxu0 %v1163
      %1707 = vmatmul.mubr.f32.gmra.mrb[0].mxu0 %v1162
      %v1708 = vpop.f32.mrb[0].mxu0
      %v1709 = vadd.f32 %v1638, %v1708
      %v1710 = vpop.f32.mrb[0].mxu0
      %v1711 = vadd.f32 %v1640, %v1710
      %1712 = vdwg.mxu0
      %1713 = vmatprep.subr.mxu0 %v1361
      %1714 = vmatpush1.msra.mxu0 %v1360
      %1715 = vmatprep.subr.mxu0 %v1363
      %1716 = vmatpush1.msra.mxu0 %v1362
      %1717 = vmatprep.subr.mxu0 %v1365
      %1718 = vmatpush1.msra.mxu0 %v1364
      %1719 = vmatprep.subr.mxu0 %v1367
      %1720 = vmatpush1.msra.mxu0 %v1366
      %1721 = vmatprep.subr.mxu0 %v1369
      %1722 = vmatpush1.msra.mxu0 %v1368
      %1723 = vmatprep.subr.mxu0 %v1371
      %1724 = vmatpush1.msra.mxu0 %v1370
      %1725 = vmatprep.subr.mxu0 %v1373
      %1726 = vmatpush1.msra.mxu0 %v1372
      %1727 = vmatprep.subr.mxu0 %v1375
      %1728 = vmatpush1.msra.mxu0 %v1374
      %1729 = vmatprep.subr.mxu0 %v1377
      %1730 = vmatpush1.msra.mxu0 %v1376
      %1731 = vmatprep.subr.mxu0 %v1379
      %1732 = vmatpush1.msra.mxu0 %v1378
      %1733 = vmatprep.subr.mxu0 %v1381
      %1734 = vmatpush1.msra.mxu0 %v1380
      %1735 = vmatprep.subr.mxu0 %v1383
      %1736 = vmatpush1.msra.mxu0 %v1382
      %1737 = vmatprep.subr.mxu0 %v1385
      %1738 = vmatpush1.msra.mxu0 %v1384
      %1739 = vmatprep.subr.mxu0 %v1387
      %1740 = vmatpush1.msra.mxu0 %v1386
      %1741 = vmatprep.subr.mxu0 %v1389
      %1742 = vmatpush1.msra.mxu0 %v1388
      %1743 = vmatprep.subr.mxu0 %v1391
      %1744 = vmatpush1.msra.mxu0 %v1390
      %1745 = vmatprep.subr.mxu0 %v1393
      %1746 = vmatpush1.msra.mxu0 %v1392
      %1747 = vmatprep.subr.mxu0 %v1395
      %1748 = vmatpush1.msra.mxu0 %v1394
      %1749 = vmatprep.subr.mxu0 %v1397
      %1750 = vmatpush1.msra.mxu0 %v1396
      %1751 = vmatprep.subr.mxu0 %v1399
      %1752 = vmatpush1.msra.mxu0 %v1398
      %1753 = vmatprep.subr.mxu0 %v1401
      %1754 = vmatpush1.msra.mxu0 %v1400
      %1755 = vmatprep.subr.mxu0 %v1403
      %1756 = vmatpush1.msra.mxu0 %v1402
      %1757 = vmatprep.subr.mxu0 %v1405
      %1758 = vmatpush1.msra.mxu0 %v1404
      %1759 = vmatprep.subr.mxu0 %v1407
      %1760 = vmatpush1.msra.mxu0 %v1406
      %1761 = vmatprep.subr.mxu0 %v1409
      %1762 = vmatpush1.msra.mxu0 %v1408
      %1763 = vmatprep.subr.mxu0 %v1411
      %1764 = vmatpush1.msra.mxu0 %v1410
      %1765 = vmatprep.subr.mxu0 %v1413
      %1766 = vmatpush1.msra.mxu0 %v1412
      %1767 = vmatprep.subr.mxu0 %v1415
      %1768 = vmatpush1.msra.mxu0 %v1414
      %1769 = vmatprep.subr.mxu0 %v1417
      %1770 = vmatpush1.msra.mxu0 %v1416
      %1771 = vmatprep.subr.mxu0 %v1419
      %1772 = vmatpush1.msra.mxu0 %v1418
      %1773 = vmatprep.subr.mxu0 %v1421
      %1774 = vmatpush1.msra.mxu0 %v1420
      %1775 = vmatprep.subr.mxu0 %v1423
      %1776 = vmatpush1.msra.mxu0 %v1422
      %1777 = vmatprep.mubr.f32.mxu0 %v1165
      %1778 = vmatmul.mubr.f32.gmra.mrb[0].mxu0 %v1164
      %v1779 = vpop.f32.mrb[0].mxu0
      %v1780 = vadd.f32 %v1709, %v1779
      %v1781 = vpop.f32.mrb[0].mxu0
      %v1782 = vadd.f32 %v1711, %v1781
      %1783 = vdwg.mxu0
      %1784 = vmatprep.subr.mxu0 %v1425
      %1785 = vmatpush1.msra.mxu0 %v1424
      %1786 = vmatprep.subr.mxu0 %v1427
      %1787 = vmatpush1.msra.mxu0 %v1426
      %1788 = vmatprep.subr.mxu0 %v1429
      %1789 = vmatpush1.msra.mxu0 %v1428
      %1790 = vmatprep.subr.mxu0 %v1431
      %1791 = vmatpush1.msra.mxu0 %v1430
      %1792 = vmatprep.subr.mxu0 %v1433
      %1793 = vmatpush1.msra.mxu0 %v1432
      %1794 = vmatprep.subr.mxu0 %v1435
      %1795 = vmatpush1.msra.mxu0 %v1434
      %1796 = vmatprep.subr.mxu0 %v1437
      %1797 = vmatpush1.msra.mxu0 %v1436
      %1798 = vmatprep.subr.mxu0 %v1439
      %1799 = vmatpush1.msra.mxu0 %v1438
      %1800 = vmatprep.subr.mxu0 %v1441
      %1801 = vmatpush1.msra.mxu0 %v1440
      %1802 = vmatprep.subr.mxu0 %v1443
      %1803 = vmatpush1.msra.mxu0 %v1442
      %1804 = vmatprep.subr.mxu0 %v1445
      %1805 = vmatpush1.msra.mxu0 %v1444
      %1806 = vmatprep.subr.mxu0 %v1447
      %1807 = vmatpush1.msra.mxu0 %v1446
      %1808 = vmatprep.subr.mxu0 %v1449
      %1809 = vmatpush1.msra.mxu0 %v1448
      %1810 = vmatprep.subr.mxu0 %v1451
      %1811 = vmatpush1.msra.mxu0 %v1450
      %1812 = vmatprep.subr.mxu0 %v1453
      %1813 = vmatpush1.msra.mxu0 %v1452
      %1814 = vmatprep.subr.mxu0 %v1455
      %1815 = vmatpush1.msra.mxu0 %v1454
      %1816 = vmatprep.subr.mxu0 %v1457
      %1817 = vmatpush1.msra.mxu0 %v1456
      %1818 = vmatprep.subr.mxu0 %v1459
      %1819 = vmatpush1.msra.mxu0 %v1458
      %1820 = vmatprep.subr.mxu0 %v1461
      %1821 = vmatpush1.msra.mxu0 %v1460
      %1822 = vmatprep.subr.mxu0 %v1463
      %1823 = vmatpush1.msra.mxu0 %v1462
      %1824 = vmatprep.subr.mxu0 %v1465
      %1825 = vmatpush1.msra.mxu0 %v1464
      %1826 = vmatprep.subr.mxu0 %v1467
      %1827 = vmatpush1.msra.mxu0 %v1466
      %1828 = vmatprep.subr.mxu0 %v1469
      %1829 = vmatpush1.msra.mxu0 %v1468
      %1830 = vmatprep.subr.mxu0 %v1471
      %1831 = vmatpush1.msra.mxu0 %v1470
      %1832 = vmatprep.subr.mxu0 %v1473
      %1833 = vmatpush1.msra.mxu0 %v1472
      %1834 = vmatprep.subr.mxu0 %v1475
      %1835 = vmatpush1.msra.mxu0 %v1474
      %1836 = vmatprep.subr.mxu0 %v1477
      %1837 = vmatpush1.msra.mxu0 %v1476
      %1838 = vmatprep.subr.mxu0 %v1479
      %1839 = vmatpush1.msra.mxu0 %v1478
      %1840 = vmatprep.subr.mxu0 %v1481
      %1841 = vmatpush1.msra.mxu0 %v1480
      %1842 = vmatprep.subr.mxu0 %v1483
      %1843 = vmatpush1.msra.mxu0 %v1482
      %1844 = vmatprep.subr.mxu0 %v1485
      %1845 = vmatpush1.msra.mxu0 %v1484
      %1846 = vmatprep.subr.mxu0 %v1487
      %1847 = vmatpush1.msra.mxu0 %v1486
      %1848 = vmatprep.mubr.f32.mxu0 %v1167
      %1849 = vmatmul.mubr.f32.gmra.mrb[0].mxu0 %v1166
      %v1850 = vpop.f32.mrb[0].mxu0
      %v1851 = vadd.f32 %v1780, %v1850
      %v1852 = vpop.f32.mrb[0].mxu0
      %v1853 = vadd.f32 %v1782, %v1852
      %1854 = vdwg.mxu0
      %v1855 = vld [vmem:[#allocation10] sm:$0x3]
      %v1857 = vlaneseq
      %v1858 = vshrl.u32 %v1857, 7
      %v1859 = vsub.s32 0, %v1858
      %v1860 = vrot.slane %v1855, %v1859
      %v1861 = vlaneseq
      %v1862 = vshrl.u32 %v1861, 7
      %v1863 = vsub.s32 1, %v1862
      %v1864 = vrot.slane %v1855, %v1863
      %v1867 = vmul.f32 %v1851, %v1860
      %v1868 = vmul.f32 %v1853, %v1864
      %v1869 = vld [vmem:[#allocation12] sm:$0x3]
      %v1871 = vlaneseq
      %v1872 = vshrl.u32 %v1871, 7
      %v1873 = vsub.s32 0, %v1872
      %v1874 = vrot.slane %v1869, %v1873
      %v1875 = vlaneseq
      %v1876 = vshrl.u32 %v1875, 7
      %v1877 = vsub.s32 1, %v1876
      %v1878 = vrot.slane %v1869, %v1877
      %v1881 = vadd.f32 %v1867, %v1874
      %v1882 = vadd.f32 %v1868, %v1878
      %v1883 = vld [vmem:[#allocation13] sm:$0xff]
      %v1884 = vld [vmem:[#allocation13 + $0x8] sm:$0xff]
      %v1885 = vld [vmem:[#allocation13 + $0x10] sm:$0xff]
      %v1886 = vld [vmem:[#allocation13 + $0x18] sm:$0xff]
      %v1887 = vld [vmem:[#allocation13 + $0x20] sm:$0xff]
      %v1888 = vld [vmem:[#allocation13 + $0x28] sm:$0xff]
      %v1889 = vld [vmem:[#allocation13 + $0x30] sm:$0xff]
      %v1890 = vld [vmem:[#allocation13 + $0x38] sm:$0xff]
      %v1891 = vld [vmem:[#allocation13 + $0x40] sm:$0xff]
      %v1892 = vld [vmem:[#allocation13 + $0x48] sm:$0xff]
      %v1893 = vld [vmem:[#allocation13 + $0x50] sm:$0xff]
      %v1894 = vld [vmem:[#allocation13 + $0x58] sm:$0xff]
      %v1895 = vld [vmem:[#allocation13 + $0x60] sm:$0xff]
      %v1896 = vld [vmem:[#allocation13 + $0x68] sm:$0xff]
      %v1897 = vld [vmem:[#allocation13 + $0x70] sm:$0xff]
      %v1898 = vld [vmem:[#allocation13 + $0x78] sm:$0xff]
      %v1899 = vld [vmem:[#allocation13 + $0x80] sm:$0xff]
      %v1900 = vld [vmem:[#allocation13 + $0x88] sm:$0xff]
      %v1901 = vld [vmem:[#allocation13 + $0x90] sm:$0xff]
      %v1902 = vld [vmem:[#allocation13 + $0x98] sm:$0xff]
      %v1903 = vld [vmem:[#allocation13 + $0xa0] sm:$0xff]
      %v1904 = vld [vmem:[#allocation13 + $0xa8] sm:$0xff]
      %v1905 = vld [vmem:[#allocation13 + $0xb0] sm:$0xff]
      %v1906 = vld [vmem:[#allocation13 + $0xb8] sm:$0xff]
      %v1907 = vld [vmem:[#allocation13 + $0xc0] sm:$0xff]
      %v1908 = vld [vmem:[#allocation13 + $0xc8] sm:$0xff]
      %v1909 = vld [vmem:[#allocation13 + $0xd0] sm:$0xff]
      %v1910 = vld [vmem:[#allocation13 + $0xd8] sm:$0xff]
      %v1911 = vld [vmem:[#allocation13 + $0xe0] sm:$0xff]
      %v1912 = vld [vmem:[#allocation13 + $0xe8] sm:$0xff]
      %v1913 = vld [vmem:[#allocation13 + $0xf0] sm:$0xff]
      %v1914 = vld [vmem:[#allocation13 + $0xf8] sm:$0xff]
      %v1915 = vld [vmem:[#allocation15] sm:$0x1]
      %v1917 = vlaneseq
      %v1918 = vshrl.u32 %v1917, 7
      %v1919 = vsub.s32 0, %v1918
      %v1920 = vrot.slane %v1915, %v1919
      %1922 = vmatprep.subr.mxu0 0.0
      %1923 = vmatpush1.msra.mxu0 %v1883
      %1924 = vmatprep.subr.mxu0 0.0
      %1925 = vmatpush1.msra.mxu0 %v1884
      %1926 = vmatprep.subr.mxu0 0.0
      %1927 = vmatpush1.msra.mxu0 %v1885
      %1928 = vmatprep.subr.mxu0 0.0
      %1929 = vmatpush1.msra.mxu0 %v1886
      %1930 = vmatprep.subr.mxu0 0.0
      %1931 = vmatpush1.msra.mxu0 %v1887
      %1932 = vmatprep.subr.mxu0 0.0
      %1933 = vmatpush1.msra.mxu0 %v1888
      %1934 = vmatprep.subr.mxu0 0.0
      %1935 = vmatpush1.msra.mxu0 %v1889
      %1936 = vmatprep.subr.mxu0 0.0
      %1937 = vmatpush1.msra.mxu0 %v1890
      %1938 = vmatprep.subr.mxu0 0.0
      %1939 = vmatpush1.msra.mxu0 %v1891
      %1940 = vmatprep.subr.mxu0 0.0
      %1941 = vmatpush1.msra.mxu0 %v1892
      %1942 = vmatprep.subr.mxu0 0.0
      %1943 = vmatpush1.msra.mxu0 %v1893
      %1944 = vmatprep.subr.mxu0 0.0
      %1945 = vmatpush1.msra.mxu0 %v1894
      %1946 = vmatprep.subr.mxu0 0.0
      %1947 = vmatpush1.msra.mxu0 %v1895
      %1948 = vmatprep.subr.mxu0 0.0
      %1949 = vmatpush1.msra.mxu0 %v1896
      %1950 = vmatprep.subr.mxu0 0.0
      %1951 = vmatpush1.msra.mxu0 %v1897
      %1952 = vmatprep.subr.mxu0 0.0
      %1953 = vmatpush1.msra.mxu0 %v1898
      %1954 = vmatprep.subr.mxu0 0.0
      %1955 = vmatpush1.msra.mxu0 %v1899
      %1956 = vmatprep.subr.mxu0 0.0
      %1957 = vmatpush1.msra.mxu0 %v1900
      %1958 = vmatprep.subr.mxu0 0.0
      %1959 = vmatpush1.msra.mxu0 %v1901
      %1960 = vmatprep.subr.mxu0 0.0
      %1961 = vmatpush1.msra.mxu0 %v1902
      %1962 = vmatprep.subr.mxu0 0.0
      %1963 = vmatpush1.msra.mxu0 %v1903
      %1964 = vmatprep.subr.mxu0 0.0
      %1965 = vmatpush1.msra.mxu0 %v1904
      %1966 = vmatprep.subr.mxu0 0.0
      %1967 = vmatpush1.msra.mxu0 %v1905
      %1968 = vmatprep.subr.mxu0 0.0
      %1969 = vmatpush1.msra.mxu0 %v1906
      %1970 = vmatprep.subr.mxu0 0.0
      %1971 = vmatpush1.msra.mxu0 %v1907
      %1972 = vmatprep.subr.mxu0 0.0
      %1973 = vmatpush1.msra.mxu0 %v1908
      %1974 = vmatprep.subr.mxu0 0.0
      %1975 = vmatpush1.msra.mxu0 %v1909
      %1976 = vmatprep.subr.mxu0 0.0
      %1977 = vmatpush1.msra.mxu0 %v1910
      %1978 = vmatprep.subr.mxu0 0.0
      %1979 = vmatpush1.msra.mxu0 %v1911
      %1980 = vmatprep.subr.mxu0 0.0
      %1981 = vmatpush1.msra.mxu0 %v1912
      %1982 = vmatprep.subr.mxu0 0.0
      %1983 = vmatpush1.msra.mxu0 %v1913
      %1984 = vmatprep.subr.mxu0 0.0
      %1985 = vmatpush1.msra.mxu0 %v1914
      %1986 = vmatprep.mubr.f32.mxu0 %v1882
      %1987 = vmatmul.mubr.f32.gmra.mrb[0].mxu0 %v1881
      %v1988 = vpop.f32.mrb[0].mxu0
      %v1989 = vadd.f32 %v1920, %v1988
      %v1990 = vpop.f32.mrb[0].mxu0
      %1991 = vdwg.mxu0
      %v1992 = vld [vmem:[#allocation16] sm:$0x1]
      %v1994 = vlaneseq
      %v1995 = vshrl.u32 %v1994, 7
      %v1996 = vsub.s32 0, %v1995
      %v1997 = vrot.slane %v1992, %v1996
      %v1999 = vmul.f32 %v1989, %v1997
      %2000 = vadd.xlane.f32.xlu0 %v1999
      %v2001 = vpop.xlane.xlu0 %2000
      %v2002 = vld [vmem:[#allocation3] sm:$0x1]
      %v2004 = vlaneseq
      %v2005 = vshrl.u32 %v2004, 7
      %v2006 = vsub.s32 0, %v2005
      %v2007 = vrot.slane %v2002, %v2006
      %v2009 = vadd.f32 %v2001, %v2007
      %v2010 = vxor.u32 %v2009, 2147483648
      %v2011 = vmul.f32 %v2010, 1.442695
      %v2012 = vpow.pop %v2011
      %v2013 = vadd.f32 %v2012, 1.0
      %v2014 = vrcp.pop %v2013
      %v2015 = vmul.f32 1.0, %v2014
      %2017 = vset.pattern.permute.xlu0 0
      %2018 = vperm.xlu0 %2017, %v2015
      %v2019 = vpop.permute.xlu0 %2018
      %2021 = vst [vmem:[#allocation18] sm:$0xff] %v2019
    $region77: #{tpu_custom_call.1} parent=1 // pred_fallthru
      _
    // Predicated region
    $region78: #{tpu_custom_call.1} parent=1 // pred_check
      _
    $region79: #{tpu_custom_call.1} parent=1 // pred_check_branch
      %2023 = sbr.rel (0) target = $region81
    $region80: #{tpu_custom_call.1} parent=1 // pred_region
      %s2025 = ssub.s32 128, 128
      %2026 = vsyncadd [#allocation6], %s2025
      %s2028 = sshll.u32 [#allocation18], 4
      %s2029 = int_to_ptr.vmem [resolvable:$true] %s2028
      %2031 = dma.vmem_to_hbm [thread:$0]  %s2029, 128, %s9, [#allocation6]
    $region81: #{tpu_custom_call.1} parent=1 // pred_fallthru
      _
    // Predicated region
    $region82: #{tpu_custom_call.1} parent=1 // pred_check
      _
    $region83: #{tpu_custom_call.1} parent=1 // pred_check_branch
      %2033 = sbr.rel (0) target = $region85
    $region84: #{tpu_custom_call.1} parent=1 // pred_region
      %2034 = dma.done [#allocation6], 128
    $region85: #{tpu_custom_call.1} parent=1 // pred_fallthru
      _
    %2035 = vsyncpa [#allocation5], 1
    %2036 = vsyncpa [#allocation8], 1
    %2037 = vsyncpa [#allocation11], 1
    %2038 = vsyncpa [#allocation14], 1
    %2039 = vsyncpa [#allocation17], 1
    %2040 = vsyncpa [#allocation6], 1

</llo_original>
